<compile_context>
chip_gen: v7x
topology: tpu7x:2x2x1
jax: 0.10.0
libtpu: 0.0.40
codegen_flags: <defaults>
</compile_context>

<pallas_src>
import functools

import jax
import jax.numpy as jnp
from jax import lax
from jax.experimental import pallas as pl
from jax.experimental.pallas import tpu as pltpu

H = 128  # hidden size of every layer in the module


def _round_up(x, m):
    return (x + m - 1) // m * m


def critic_kernel(hist_ref, obs_ref, act_ref, seg_ref, w_ref, b_ref, out_ref,
                  *, T, B, Po, Pa):
    # Packed bf16 weight slab layout (all offsets multiples of 16 -> aligned):
    #   [0, Po)            hist_linear1^T            (zero-padded rows)
    #   [Po, 2Po)          cur_feature_linear1^T, obs half
    #   [2Po, W0)          cur_feature_linear1^T, act half
    #   [W0+0H, W0+1H)     W_ih^T
    #   [W0+1H, W0+2H)     W_hh^T
    #   [W0+2H, W0+3H)     cur_feature_linear2^T
    #   [W0+3H, W0+4H)     combined_linear1^T, hist half
    #   [W0+4H, W0+5H)     combined_linear1^T, cur half
    W0 = 2 * Po + Pa

    # Bias / final-row slab (f32, one vreg total).
    b1, brnn = b_ref[0:1, :], b_ref[1:2, :]
    bc1, bc2 = b_ref[2:3, :], b_ref[3:4, :]
    b3 = b_ref[4:5, :]
    w4row = b_ref[5:6, :]
    b4 = b_ref[6:7, 0:1]

    # ---- current-feature branch first: independent of the RNN chain, its
    # MXU/VPU work fills slots while the serial recurrence below stalls.
    c = jnp.maximum(
        jnp.dot(obs_ref[...].astype(jnp.bfloat16), w_ref[Po:2 * Po, :],
                preferred_element_type=jnp.float32)
        + jnp.dot(act_ref[...].astype(jnp.bfloat16), w_ref[2 * Po:W0, :],
                  preferred_element_type=jnp.float32)
        + bc1, 0.0)
    c = jnp.maximum(
        jnp.dot(c.astype(jnp.bfloat16), w_ref[W0 + 2 * H:W0 + 3 * H, :],
                preferred_element_type=jnp.float32)
        + bc2, 0.0)                                               # (B, 128)

    # ---- hoisted input projections over ALL timesteps at once.
    # hist_ref is time-major flattened: row t*B + b  ->  (t, b).
    xt = jnp.maximum(
        jnp.dot(hist_ref[...].astype(jnp.bfloat16), w_ref[0:Po, :],
                preferred_element_type=jnp.float32) + b1, 0.0)    # (T*B, 128)
    pre = (jnp.dot(xt.astype(jnp.bfloat16), w_ref[W0:W0 + H, :],
                   preferred_element_type=jnp.float32)
           + brnn)                                                # (T*B, 128)
    # brnn = b_ih + b_hh, so the loop body is just tanh(pre_t + h @ W_hh).

    seg = seg_ref[...]                    # (B, 1) int32, clamped to [1, T]
    last_idx = seg - 1                    # keep h at t == seg - 1

    # t = 0: h_prev is zero, so no W_hh matmul needed.
    h = jnp.tanh(pre[0:B, :])
    hout = jnp.where(last_idx == 0, h, jnp.zeros((B, H), jnp.float32))

    # Static unroll (T is small and fixed): only h @ W_hh + tanh sits on the
    # serial chain; W_hh is re-streamed from VMEM each step (no vreg pinning).
    # TODO(synk): drive this weight-stationary (pltpu.matmul_push_rhs W_hh
    # once, matmul_acc_lhs/matmul_pop per step) once a bundle dump confirms
    # the per-step RHS push is on the critical path.
    for t in range(1, T):
        pre_t = pre[t * B:(t + 1) * B, :]
        h = jnp.tanh(pre_t + jnp.dot(h.astype(jnp.bfloat16),
                                     w_ref[W0 + H:W0 + 2 * H, :],
                                     preferred_element_type=jnp.float32))
        hout = jnp.where(last_idx == t, h, hout)

    # combined_linear1 on cat[hist_out, cur] == hout @ W3h + c @ W3c
    comb = jnp.maximum(
        jnp.dot(hout.astype(jnp.bfloat16), w_ref[W0 + 3 * H:W0 + 4 * H, :],
                preferred_element_type=jnp.float32)
        + jnp.dot(c.astype(jnp.bfloat16), w_ref[W0 + 4 * H:W0 + 5 * H, :],
                  preferred_element_type=jnp.float32)
        + b3, 0.0)                                                # (B, 128)

    # combined_linear2 (128 -> 1) as VPU multiply + lane reduction (XLU slot):
    # avoids an N=1 MXU pass.
    out_ref[...] = jnp.sum(comb * w4row, axis=-1, keepdims=True) + b4


def init_params(key, obs_dim, act_dim):
    """Deterministic init mimicking PyTorch's uniform(-1/sqrt(fan_in), ...)."""
    def lin(k, fan_in, fan_out):
        k1, k2 = jax.random.split(k)
        bound = 1.0 / float(fan_in) ** 0.5
        w = jax.random.uniform(k1, (fan_out, fan_in), jnp.float32, -bound, bound)
        b = jax.random.uniform(k2, (fan_out,), jnp.float32, -bound, bound)
        return w, b

    keys = jax.random.split(key, 7)
    p = {}
    p['hist_w1'], p['hist_b1'] = lin(keys[0], obs_dim, H)          # Linear(obs, 128)
    p['w_ih'], p['b_ih'] = lin(keys[1], H, H)                      # RNN input->hidden
    p['w_hh'], p['b_hh'] = lin(keys[2], H, H)                      # RNN hidden->hidden
    p['cur_w1'], p['cur_b1'] = lin(keys[3], obs_dim + act_dim, H)  # Linear(obs+act,128)
    p['cur_w2'], p['cur_b2'] = lin(keys[4], H, H)                  # Linear(128,128)
    p['comb_w1'], p['comb_b1'] = lin(keys[5], 2 * H, H)            # Linear(256,128)
    p['comb_w2'], p['comb_b2'] = lin(keys[6], H, 1)                # Linear(128,1)
    return p


def prep_params(params, obs_dim, act_dim):
    """One-time weight prep (amortized across calls):
      * every matmul weight transposed to (in, out), cast to bf16, and packed
        into ONE row slab with 16-aligned offsets (zero-cost in-kernel views),
      * cur_feature_linear1 split into its obs / act halves,
      * combined_linear1 split into its hist / cur halves,
      * the two RNN biases folded into one,
      * the 7 bias / final-row vectors packed into ONE (8,128) f32 slab."""
    Po = _round_up(obs_dim, 16)
    Pa = _round_up(act_dim, 16)

    def padrows(w, rows):
        return jnp.pad(w, ((0, rows - w.shape[0]), (0, 0)))

    w1_t = jnp.transpose(params['hist_w1'])            # (obs, 128)
    wc1_t = jnp.transpose(params['cur_w1'])            # (obs+act, 128)
    w_slab = jnp.concatenate([
        padrows(w1_t, Po),                              # [0, Po)
        padrows(wc1_t[:obs_dim], Po),                   # [Po, 2Po)
        padrows(wc1_t[obs_dim:], Pa),                   # [2Po, W0)
        jnp.transpose(params['w_ih']),                  # W0 + 0H
        jnp.transpose(params['w_hh']),                  # W0 + 1H
        jnp.transpose(params['cur_w2']),                # W0 + 2H
        jnp.transpose(params['comb_w1'][:, :H]),        # W0 + 3H
        jnp.transpose(params['comb_w1'][:, H:]),        # W0 + 4H
    ], axis=0).astype(jnp.bfloat16)                     # (2Po+Pa+5H, 128)

    b_slab = jnp.zeros((8, H), jnp.float32)
    b_slab = b_slab.at[0].set(params['hist_b1'])
    b_slab = b_slab.at[1].set(params['b_ih'] + params['b_hh'])
    b_slab = b_slab.at[2].set(params['cur_b1'])
    b_slab = b_slab.at[3].set(params['cur_b2'])
    b_slab = b_slab.at[4].set(params['comb_b1'])
    b_slab = b_slab.at[5].set(params['comb_w2'].reshape(H))
    b_slab = b_slab.at[6].set(jnp.full((H,), params['comb_b2'][0]))
    return {'w_slab': w_slab, 'b_slab': b_slab}


@jax.jit
def rnn_td3_critic(kparams, obs, act, hist_obs, hist_act, hist_seg_len):
    # TODO(synk): for TD3's twin critics, stack Q1/Q2 weight slabs so both
    # critics share one kernel launch (doubles M per matmul, halves the fixed
    # launch + weight-DMA cost), or prefetch the weight slab via a
    # cross-pallas_call DMA future started before the preceding ops.
    del hist_act  # unused by the PyTorch forward as well
    B, T, obs_dim = hist_obs.shape
    act_dim = act.shape[-1]
    Po, Pa = _round_up(obs_dim, 16), _round_up(act_dim, 16)
    Bp = _round_up(B, 8)                         # sublane-align the batch

    # Tiny per-call activation prep only: zero-pad, time-major flatten, clamp.
    obs_p = jnp.pad(obs.astype(jnp.float32), ((0, Bp - B), (0, Po - obs_dim)))
    act_p = jnp.pad(act.astype(jnp.float32), ((0, Bp - B), (0, Pa - act_dim)))
    hist_p = jnp.pad(hist_obs.astype(jnp.float32),
                     ((0, Bp - B), (0, 0), (0, Po - obs_dim)))
    hist_tm = jnp.transpose(hist_p, (1, 0, 2)).reshape(T * Bp, Po)  # (T*Bp, Po)
    seg = jnp.clip(hist_seg_len.astype(jnp.int32), 1, T)   # covers seg_len == 0
    seg = jnp.pad(seg, (0, Bp - B), constant_values=1).reshape(Bp, 1)

    vmem = pl.BlockSpec(memory_space=pltpu.MemorySpace.VMEM)
    out = pl.pallas_call(
        functools.partial(critic_kernel, T=T, B=Bp, Po=Po, Pa=Pa),
        out_shape=jax.ShapeDtypeStruct((Bp, 1), jnp.float32),
        in_specs=[vmem] * 6,
        out_specs=vmem,
        # Single grid point, everything VMEM-resident -> no grid / pipelining.
        # TODO(synk): if B grows to >= ~128, add a leading "parallel" batch
        # grid axis (constant index_maps for the weight slabs) so v7x's two
        # TensorCores split the batch.
    )(hist_tm, obs_p, act_p, seg, kparams['w_slab'], kparams['b_slab'])
    return out[:B, 0]


def reference(params, obs, act, hist_obs, hist_act, hist_seg_len):
    """Pure-JAX f32 reference of the PyTorch forward."""
    del hist_act
    B, T, _ = hist_obs.shape
    seg = jnp.where(hist_seg_len == 0, 1, hist_seg_len)
    x = jax.nn.relu(hist_obs @ params['hist_w1'].T + params['hist_b1'])

    def step(h, x_t):
        h = jnp.tanh(x_t @ params['w_ih'].T + params['b_ih']
                     + h @ params['w_hh'].T + params['b_hh'])
        return h, h

    _, hs = lax.scan(step, jnp.zeros((B, H), jnp.float32),
                     jnp.transpose(x, (1, 0, 2)))
    hs = jnp.transpose(hs, (1, 0, 2))                      # (B, T, H)
    hist_out = hs[jnp.arange(B), seg - 1]                  # gather at seg-1

    c = jax.nn.relu(jnp.concatenate([obs, act], -1) @ params['cur_w1'].T
                    + params['cur_b1'])
    c = jax.nn.relu(c @ params['cur_w2'].T + params['cur_b2'])
    z = jax.nn.relu(jnp.concatenate([hist_out, c], -1) @ params['comb_w1'].T
                    + params['comb_b1'])
    return (z @ params['comb_w2'].T + params['comb_b2'])[:, 0]


if __name__ == "__main__":
    B, T, obs_dim, act_dim = 8, 8, 16, 4

    key = jax.random.PRNGKey(0)
    k_obs, k_act, k_hobs, k_hact, k_seg, k_par = jax.random.split(key, 6)

    obs = jax.random.normal(k_obs, (B, obs_dim), jnp.float32)
    act = jax.random.normal(k_act, (B, act_dim), jnp.float32)
    hist_obs = jax.random.normal(k_hobs, (B, T, obs_dim), jnp.float32)
    hist_act = jax.random.normal(k_hact, (B, T, act_dim), jnp.float32)
    hist_seg_len = jax.random.randint(k_seg, (B,), 0, T + 1, jnp.int32)
    hist_seg_len = hist_seg_len.at[0].set(0)  # exercise the seg_len==0 clamp

    params = init_params(k_par, obs_dim, act_dim)
    kparams = prep_params(params, obs_dim, act_dim)  # one-time packing

    q = rnn_td3_critic(kparams, obs, act, hist_obs, hist_act, hist_seg_len)
    q = jax.block_until_ready(q)

    q_ref = reference(params, obs, act, hist_obs, hist_act, hist_seg_len)
    assert q.shape == (B,)
    # Tolerance accounts for bf16 weight operands (f32 accumulation / chain).
    assert jnp.allclose(q, q_ref, rtol=2e-2, atol=2e-2), (q, q_ref)

    print("KERNEL_OK")
</pallas_src>

<mosaic_0001>
module attributes {stable_mosaic.version = 11 : i64} {
  func.func @critic_kernel(%arg0: memref<64x16xf32, #tpu.memory_space<vmem>>, %arg1: memref<8x16xf32, #tpu.memory_space<vmem>>, %arg2: memref<8x16xf32, #tpu.memory_space<vmem>>, %arg3: memref<8x1xi32, #tpu.memory_space<vmem>>, %arg4: memref<688x128xbf16, #tpu.memory_space<vmem>>, %arg5: memref<8x128xf32, #tpu.memory_space<vmem>>, %arg6: memref<8x1xf32, #tpu.memory_space<vmem>>) attributes {dimension_semantics = [], scalar_prefetch = 0 : i64, scratch_operands = 0 : i64, tpu.core_type = #tpu.core_type<tc>} {
    %c0 = arith.constant 0 : index
    %c0_0 = arith.constant 0 : index
    %0 = vector.load %arg5[%c0, %c0_0] : memref<8x128xf32, #tpu.memory_space<vmem>>, vector<1x128xf32>
    %c1 = arith.constant 1 : index
    %c0_1 = arith.constant 0 : index
    %1 = vector.load %arg5[%c1, %c0_1] : memref<8x128xf32, #tpu.memory_space<vmem>>, vector<1x128xf32>
    %c2 = arith.constant 2 : index
    %c0_2 = arith.constant 0 : index
    %2 = vector.load %arg5[%c2, %c0_2] : memref<8x128xf32, #tpu.memory_space<vmem>>, vector<1x128xf32>
    %c3 = arith.constant 3 : index
    %c0_3 = arith.constant 0 : index
    %3 = vector.load %arg5[%c3, %c0_3] : memref<8x128xf32, #tpu.memory_space<vmem>>, vector<1x128xf32>
    %c4 = arith.constant 4 : index
    %c0_4 = arith.constant 0 : index
    %4 = vector.load %arg5[%c4, %c0_4] : memref<8x128xf32, #tpu.memory_space<vmem>>, vector<1x128xf32>
    %c5 = arith.constant 5 : index
    %c0_5 = arith.constant 0 : index
    %5 = vector.load %arg5[%c5, %c0_5] : memref<8x128xf32, #tpu.memory_space<vmem>>, vector<1x128xf32>
    %c6 = arith.constant 6 : index
    %c0_6 = arith.constant 0 : index
    %6 = vector.load %arg5[%c6, %c0_6] : memref<8x128xf32, #tpu.memory_space<vmem>>, vector<1x1xf32>
    %c0_7 = arith.constant 0 : index
    %c0_8 = arith.constant 0 : index
    %7 = vector.load %arg1[%c0_7, %c0_8] : memref<8x16xf32, #tpu.memory_space<vmem>>, vector<8x16xf32>
    %8 = arith.truncf %7 : vector<8x16xf32> to vector<8x16xbf16>
    %c16 = arith.constant 16 : index
    %c0_9 = arith.constant 0 : index
    %9 = vector.load %arg4[%c16, %c0_9] : memref<688x128xbf16, #tpu.memory_space<vmem>>, vector<16x128xbf16>
    %cst = arith.constant dense<0.000000e+00> : vector<8x128xf32>
    %10 = tpu.matmul %8, %9, %cst {dimension_numbers = #tpu.dot_dimension_numbers<[1], [0], [0], [1], [0, 0, 1, 1], [], []>} : vector<8x16xbf16>, vector<16x128xbf16>, vector<8x128xf32> -> vector<8x128xf32>
    %c0_10 = arith.constant 0 : index
    %c0_11 = arith.constant 0 : index
    %11 = vector.load %arg2[%c0_10, %c0_11] : memref<8x16xf32, #tpu.memory_space<vmem>>, vector<8x16xf32>
    %12 = arith.truncf %11 : vector<8x16xf32> to vector<8x16xbf16>
    %c32 = arith.constant 32 : index
    %c0_12 = arith.constant 0 : index
    %13 = vector.load %arg4[%c32, %c0_12] : memref<688x128xbf16, #tpu.memory_space<vmem>>, vector<16x128xbf16>
    %cst_13 = arith.constant dense<0.000000e+00> : vector<8x128xf32>
    %14 = tpu.matmul %12, %13, %cst_13 {dimension_numbers = #tpu.dot_dimension_numbers<[1], [0], [0], [1], [0, 0, 1, 1], [], []>} : vector<8x16xbf16>, vector<16x128xbf16>, vector<8x128xf32> -> vector<8x128xf32>
    %15 = arith.addf %10, %14 : vector<8x128xf32>
    %16 = vector.broadcast %2 : vector<1x128xf32> to vector<8x128xf32>
    %17 = arith.addf %15, %16 : vector<8x128xf32>
    %cst_14 = arith.constant 0.000000e+00 : f32
    %18 = vector.broadcast %cst_14 : f32 to vector<8x128xf32>
    %19 = arith.maximumf %17, %18 : vector<8x128xf32>
    %20 = arith.truncf %19 : vector<8x128xf32> to vector<8x128xbf16>
    %c304 = arith.constant 304 : index
    %c0_15 = arith.constant 0 : index
    %21 = vector.load %arg4[%c304, %c0_15] : memref<688x128xbf16, #tpu.memory_space<vmem>>, vector<128x128xbf16>
    %cst_16 = arith.constant dense<0.000000e+00> : vector<8x128xf32>
    %22 = tpu.matmul %20, %21, %cst_16 {dimension_numbers = #tpu.dot_dimension_numbers<[1], [0], [0], [1], [0, 0, 1, 1], [], []>} : vector<8x128xbf16>, vector<128x128xbf16>, vector<8x128xf32> -> vector<8x128xf32>
    %23 = vector.broadcast %3 : vector<1x128xf32> to vector<8x128xf32>
    %24 = arith.addf %22, %23 : vector<8x128xf32>
    %cst_17 = arith.constant 0.000000e+00 : f32
    %25 = vector.broadcast %cst_17 : f32 to vector<8x128xf32>
    %26 = arith.maximumf %24, %25 : vector<8x128xf32>
    %c0_18 = arith.constant 0 : index
    %c0_19 = arith.constant 0 : index
    %27 = vector.load %arg0[%c0_18, %c0_19] : memref<64x16xf32, #tpu.memory_space<vmem>>, vector<64x16xf32>
    %28 = arith.truncf %27 : vector<64x16xf32> to vector<64x16xbf16>
    %c0_20 = arith.constant 0 : index
    %c0_21 = arith.constant 0 : index
    %29 = vector.load %arg4[%c0_20, %c0_21] : memref<688x128xbf16, #tpu.memory_space<vmem>>, vector<16x128xbf16>
    %cst_22 = arith.constant dense<0.000000e+00> : vector<64x128xf32>
    %30 = tpu.matmul %28, %29, %cst_22 {dimension_numbers = #tpu.dot_dimension_numbers<[1], [0], [0], [1], [0, 0, 1, 1], [], []>} : vector<64x16xbf16>, vector<16x128xbf16>, vector<64x128xf32> -> vector<64x128xf32>
    %31 = vector.broadcast %0 : vector<1x128xf32> to vector<64x128xf32>
    %32 = arith.addf %30, %31 : vector<64x128xf32>
    %cst_23 = arith.constant 0.000000e+00 : f32
    %33 = vector.broadcast %cst_23 : f32 to vector<64x128xf32>
    %34 = arith.maximumf %32, %33 : vector<64x128xf32>
    %35 = arith.truncf %34 : vector<64x128xf32> to vector<64x128xbf16>
    %c48 = arith.constant 48 : index
    %c0_24 = arith.constant 0 : index
    %36 = vector.load %arg4[%c48, %c0_24] : memref<688x128xbf16, #tpu.memory_space<vmem>>, vector<128x128xbf16>
    %cst_25 = arith.constant dense<0.000000e+00> : vector<64x128xf32>
    %37 = tpu.matmul %35, %36, %cst_25 {dimension_numbers = #tpu.dot_dimension_numbers<[1], [0], [0], [1], [0, 0, 1, 1], [], []>} : vector<64x128xbf16>, vector<128x128xbf16>, vector<64x128xf32> -> vector<64x128xf32>
    %38 = vector.broadcast %1 : vector<1x128xf32> to vector<64x128xf32>
    %39 = arith.addf %37, %38 : vector<64x128xf32>
    %c0_26 = arith.constant 0 : index
    %c0_27 = arith.constant 0 : index
    %40 = vector.load %arg3[%c0_26, %c0_27] : memref<8x1xi32, #tpu.memory_space<vmem>>, vector<8x1xi32>
    %c1_i32 = arith.constant 1 : i32
    %41 = vector.broadcast %c1_i32 : i32 to vector<8x1xi32>
    %42 = arith.subi %40, %41 : vector<8x1xi32>
    %43 = vector.extract_strided_slice %39 {offsets = [0, 0], sizes = [8, 128], strides = [1, 1]} : vector<64x128xf32> to vector<8x128xf32>
    %44 = math.tanh %43 : vector<8x128xf32>
    %c0_i32 = arith.constant 0 : i32
    %45 = vector.broadcast %c0_i32 : i32 to vector<8x1xi32>
    %46 = arith.cmpi eq, %42, %45 : vector<8x1xi32>
    %cst_28 = arith.constant 0.000000e+00 : f32
    %47 = vector.broadcast %cst_28 : f32 to vector<8x128xf32>
    %48 = vector.shape_cast %46 : vector<8x1xi1> to vector<8x1xi1>
    %49 = vector.broadcast %48 : vector<8x1xi1> to vector<8x128xi1>
    %50 = arith.select %49, %44, %47 : vector<8x128xi1>, vector<8x128xf32>
    %51 = vector.extract_strided_slice %39 {offsets = [8, 0], sizes = [8, 128], strides = [1, 1]} : vector<64x128xf32> to vector<8x128xf32>
    %52 = arith.truncf %44 : vector<8x128xf32> to vector<8x128xbf16>
    %c176 = arith.constant 176 : index
    %c0_29 = arith.constant 0 : index
    %53 = vector.load %arg4[%c176, %c0_29] : memref<688x128xbf16, #tpu.memory_space<vmem>>, vector<128x128xbf16>
    %cst_30 = arith.constant dense<0.000000e+00> : vector<8x128xf32>
    %54 = tpu.matmul %52, %53, %cst_30 {dimension_numbers = #tpu.dot_dimension_numbers<[1], [0], [0], [1], [0, 0, 1, 1], [], []>} : vector<8x128xbf16>, vector<128x128xbf16>, vector<8x128xf32> -> vector<8x128xf32>
    %55 = arith.addf %51, %54 : vector<8x128xf32>
    %56 = math.tanh %55 : vector<8x128xf32>
    %c1_i32_31 = arith.constant 1 : i32
    %57 = vector.broadcast %c1_i32_31 : i32 to vector<8x1xi32>
    %58 = arith.cmpi eq, %42, %57 : vector<8x1xi32>
    %59 = vector.shape_cast %58 : vector<8x1xi1> to vector<8x1xi1>
    %60 = vector.broadcast %59 : vector<8x1xi1> to vector<8x128xi1>
    %61 = arith.select %60, %56, %50 : vector<8x128xi1>, vector<8x128xf32>
    %62 = vector.extract_strided_slice %39 {offsets = [16, 0], sizes = [8, 128], strides = [1, 1]} : vector<64x128xf32> to vector<8x128xf32>
    %63 = arith.truncf %56 : vector<8x128xf32> to vector<8x128xbf16>
    %c176_32 = arith.constant 176 : index
    %c0_33 = arith.constant 0 : index
    %64 = vector.load %arg4[%c176_32, %c0_33] : memref<688x128xbf16, #tpu.memory_space<vmem>>, vector<128x128xbf16>
    %cst_34 = arith.constant dense<0.000000e+00> : vector<8x128xf32>
    %65 = tpu.matmul %63, %64, %cst_34 {dimension_numbers = #tpu.dot_dimension_numbers<[1], [0], [0], [1], [0, 0, 1, 1], [], []>} : vector<8x128xbf16>, vector<128x128xbf16>, vector<8x128xf32> -> vector<8x128xf32>
    %66 = arith.addf %62, %65 : vector<8x128xf32>
    %67 = math.tanh %66 : vector<8x128xf32>
    %c2_i32 = arith.constant 2 : i32
    %68 = vector.broadcast %c2_i32 : i32 to vector<8x1xi32>
    %69 = arith.cmpi eq, %42, %68 : vector<8x1xi32>
    %70 = vector.shape_cast %69 : vector<8x1xi1> to vector<8x1xi1>
    %71 = vector.broadcast %70 : vector<8x1xi1> to vector<8x128xi1>
    %72 = arith.select %71, %67, %61 : vector<8x128xi1>, vector<8x128xf32>
    %73 = vector.extract_strided_slice %39 {offsets = [24, 0], sizes = [8, 128], strides = [1, 1]} : vector<64x128xf32> to vector<8x128xf32>
    %74 = arith.truncf %67 : vector<8x128xf32> to vector<8x128xbf16>
    %c176_35 = arith.constant 176 : index
    %c0_36 = arith.constant 0 : index
    %75 = vector.load %arg4[%c176_35, %c0_36] : memref<688x128xbf16, #tpu.memory_space<vmem>>, vector<128x128xbf16>
    %cst_37 = arith.constant dense<0.000000e+00> : vector<8x128xf32>
    %76 = tpu.matmul %74, %75, %cst_37 {dimension_numbers = #tpu.dot_dimension_numbers<[1], [0], [0], [1], [0, 0, 1, 1], [], []>} : vector<8x128xbf16>, vector<128x128xbf16>, vector<8x128xf32> -> vector<8x128xf32>
    %77 = arith.addf %73, %76 : vector<8x128xf32>
    %78 = math.tanh %77 : vector<8x128xf32>
    %c3_i32 = arith.constant 3 : i32
    %79 = vector.broadcast %c3_i32 : i32 to vector<8x1xi32>
    %80 = arith.cmpi eq, %42, %79 : vector<8x1xi32>
    %81 = vector.shape_cast %80 : vector<8x1xi1> to vector<8x1xi1>
    %82 = vector.broadcast %81 : vector<8x1xi1> to vector<8x128xi1>
    %83 = arith.select %82, %78, %72 : vector<8x128xi1>, vector<8x128xf32>
    %84 = vector.extract_strided_slice %39 {offsets = [32, 0], sizes = [8, 128], strides = [1, 1]} : vector<64x128xf32> to vector<8x128xf32>
    %85 = arith.truncf %78 : vector<8x128xf32> to vector<8x128xbf16>
    %c176_38 = arith.constant 176 : index
    %c0_39 = arith.constant 0 : index
    %86 = vector.load %arg4[%c176_38, %c0_39] : memref<688x128xbf16, #tpu.memory_space<vmem>>, vector<128x128xbf16>
    %cst_40 = arith.constant dense<0.000000e+00> : vector<8x128xf32>
    %87 = tpu.matmul %85, %86, %cst_40 {dimension_numbers = #tpu.dot_dimension_numbers<[1], [0], [0], [1], [0, 0, 1, 1], [], []>} : vector<8x128xbf16>, vector<128x128xbf16>, vector<8x128xf32> -> vector<8x128xf32>
    %88 = arith.addf %84, %87 : vector<8x128xf32>
    %89 = math.tanh %88 : vector<8x128xf32>
    %c4_i32 = arith.constant 4 : i32
    %90 = vector.broadcast %c4_i32 : i32 to vector<8x1xi32>
    %91 = arith.cmpi eq, %42, %90 : vector<8x1xi32>
    %92 = vector.shape_cast %91 : vector<8x1xi1> to vector<8x1xi1>
    %93 = vector.broadcast %92 : vector<8x1xi1> to vector<8x128xi1>
    %94 = arith.select %93, %89, %83 : vector<8x128xi1>, vector<8x128xf32>
    %95 = vector.extract_strided_slice %39 {offsets = [40, 0], sizes = [8, 128], strides = [1, 1]} : vector<64x128xf32> to vector<8x128xf32>
    %96 = arith.truncf %89 : vector<8x128xf32> to vector<8x128xbf16>
    %c176_41 = arith.constant 176 : index
    %c0_42 = arith.constant 0 : index
    %97 = vector.load %arg4[%c176_41, %c0_42] : memref<688x128xbf16, #tpu.memory_space<vmem>>, vector<128x128xbf16>
    %cst_43 = arith.constant dense<0.000000e+00> : vector<8x128xf32>
    %98 = tpu.matmul %96, %97, %cst_43 {dimension_numbers = #tpu.dot_dimension_numbers<[1], [0], [0], [1], [0, 0, 1, 1], [], []>} : vector<8x128xbf16>, vector<128x128xbf16>, vector<8x128xf32> -> vector<8x128xf32>
    %99 = arith.addf %95, %98 : vector<8x128xf32>
    %100 = math.tanh %99 : vector<8x128xf32>
    %c5_i32 = arith.constant 5 : i32
    %101 = vector.broadcast %c5_i32 : i32 to vector<8x1xi32>
    %102 = arith.cmpi eq, %42, %101 : vector<8x1xi32>
    %103 = vector.shape_cast %102 : vector<8x1xi1> to vector<8x1xi1>
    %104 = vector.broadcast %103 : vector<8x1xi1> to vector<8x128xi1>
    %105 = arith.select %104, %100, %94 : vector<8x128xi1>, vector<8x128xf32>
    %106 = vector.extract_strided_slice %39 {offsets = [48, 0], sizes = [8, 128], strides = [1, 1]} : vector<64x128xf32> to vector<8x128xf32>
    %107 = arith.truncf %100 : vector<8x128xf32> to vector<8x128xbf16>
    %c176_44 = arith.constant 176 : index
    %c0_45 = arith.constant 0 : index
    %108 = vector.load %arg4[%c176_44, %c0_45] : memref<688x128xbf16, #tpu.memory_space<vmem>>, vector<128x128xbf16>
    %cst_46 = arith.constant dense<0.000000e+00> : vector<8x128xf32>
    %109 = tpu.matmul %107, %108, %cst_46 {dimension_numbers = #tpu.dot_dimension_numbers<[1], [0], [0], [1], [0, 0, 1, 1], [], []>} : vector<8x128xbf16>, vector<128x128xbf16>, vector<8x128xf32> -> vector<8x128xf32>
    %110 = arith.addf %106, %109 : vector<8x128xf32>
    %111 = math.tanh %110 : vector<8x128xf32>
    %c6_i32 = arith.constant 6 : i32
    %112 = vector.broadcast %c6_i32 : i32 to vector<8x1xi32>
    %113 = arith.cmpi eq, %42, %112 : vector<8x1xi32>
    %114 = vector.shape_cast %113 : vector<8x1xi1> to vector<8x1xi1>
    %115 = vector.broadcast %114 : vector<8x1xi1> to vector<8x128xi1>
    %116 = arith.select %115, %111, %105 : vector<8x128xi1>, vector<8x128xf32>
    %117 = vector.extract_strided_slice %39 {offsets = [56, 0], sizes = [8, 128], strides = [1, 1]} : vector<64x128xf32> to vector<8x128xf32>
    %118 = arith.truncf %111 : vector<8x128xf32> to vector<8x128xbf16>
    %c176_47 = arith.constant 176 : index
    %c0_48 = arith.constant 0 : index
    %119 = vector.load %arg4[%c176_47, %c0_48] : memref<688x128xbf16, #tpu.memory_space<vmem>>, vector<128x128xbf16>
    %cst_49 = arith.constant dense<0.000000e+00> : vector<8x128xf32>
    %120 = tpu.matmul %118, %119, %cst_49 {dimension_numbers = #tpu.dot_dimension_numbers<[1], [0], [0], [1], [0, 0, 1, 1], [], []>} : vector<8x128xbf16>, vector<128x128xbf16>, vector<8x128xf32> -> vector<8x128xf32>
    %121 = arith.addf %117, %120 : vector<8x128xf32>
    %122 = math.tanh %121 : vector<8x128xf32>
    %c7_i32 = arith.constant 7 : i32
    %123 = vector.broadcast %c7_i32 : i32 to vector<8x1xi32>
    %124 = arith.cmpi eq, %42, %123 : vector<8x1xi32>
    %125 = vector.shape_cast %124 : vector<8x1xi1> to vector<8x1xi1>
    %126 = vector.broadcast %125 : vector<8x1xi1> to vector<8x128xi1>
    %127 = arith.select %126, %122, %116 : vector<8x128xi1>, vector<8x128xf32>
    %128 = arith.truncf %127 : vector<8x128xf32> to vector<8x128xbf16>
    %c432 = arith.constant 432 : index
    %c0_50 = arith.constant 0 : index
    %129 = vector.load %arg4[%c432, %c0_50] : memref<688x128xbf16, #tpu.memory_space<vmem>>, vector<128x128xbf16>
    %cst_51 = arith.constant dense<0.000000e+00> : vector<8x128xf32>
    %130 = tpu.matmul %128, %129, %cst_51 {dimension_numbers = #tpu.dot_dimension_numbers<[1], [0], [0], [1], [0, 0, 1, 1], [], []>} : vector<8x128xbf16>, vector<128x128xbf16>, vector<8x128xf32> -> vector<8x128xf32>
    %131 = arith.truncf %26 : vector<8x128xf32> to vector<8x128xbf16>
    %c560 = arith.constant 560 : index
    %c0_52 = arith.constant 0 : index
    %132 = vector.load %arg4[%c560, %c0_52] : memref<688x128xbf16, #tpu.memory_space<vmem>>, vector<128x128xbf16>
    %cst_53 = arith.constant dense<0.000000e+00> : vector<8x128xf32>
    %133 = tpu.matmul %131, %132, %cst_53 {dimension_numbers = #tpu.dot_dimension_numbers<[1], [0], [0], [1], [0, 0, 1, 1], [], []>} : vector<8x128xbf16>, vector<128x128xbf16>, vector<8x128xf32> -> vector<8x128xf32>
    %134 = arith.addf %130, %133 : vector<8x128xf32>
    %135 = vector.broadcast %4 : vector<1x128xf32> to vector<8x128xf32>
    %136 = arith.addf %134, %135 : vector<8x128xf32>
    %cst_54 = arith.constant 0.000000e+00 : f32
    %137 = vector.broadcast %cst_54 : f32 to vector<8x128xf32>
    %138 = arith.maximumf %136, %137 : vector<8x128xf32>
    %139 = vector.broadcast %5 : vector<1x128xf32> to vector<8x128xf32>
    %140 = arith.mulf %138, %139 : vector<8x128xf32>
    %cst_55 = arith.constant dense<0.000000e+00> : vector<8xf32>
    %141 = vector.multi_reduction <add>, %140, %cst_55 [1] : vector<8x128xf32> to vector<8xf32>
    %142 = vector.shape_cast %141 : vector<8xf32> to vector<8x1xf32>
    %143 = vector.broadcast %6 : vector<1x1xf32> to vector<8x1xf32>
    %144 = arith.addf %142, %143 : vector<8x1xf32>
    %c0_56 = arith.constant 0 : index
    %c0_57 = arith.constant 0 : index
    %145 = vector.load %arg6[%c0_56, %c0_57] : memref<8x1xf32, #tpu.memory_space<vmem>>, vector<8x1xf32>
    tpu.vector_store %arg6[%c0_56, %c0_57], %144 {strides = array<i32>} : memref<8x1xf32, #tpu.memory_space<vmem>>, vector<8x1xf32>,
    return
  }
}

</mosaic_0001>

<llo_original>
// kernel: rnn_td3_critic.1
$region0: #{rnn_td3_critic.1}
  #allocation0 [shape = 'u32[]', space=smem, size = 0x4, offset = 0x4, fixed_abs, tag = 'smem constant byte address 0x4 - core index']
  #allocation1 [shape = 'u32[144,128]{1,0:T(1,128)}', space=vmem, size = 0x12000, scoped, tag = 'internal scratch']
  %s0 = inlined_call_operand.vmem [shape: f32[64,16], index: 0, kind: input, shape index: {}]
  %s1 = inlined_call_operand.vmem [shape: f32[8,16], index: 1, kind: input, shape index: {}]
  %s2 = inlined_call_operand.vmem [shape: f32[8,16], index: 2, kind: input, shape index: {}]
  %s3 = inlined_call_operand.vmem [shape: s32[8,1], index: 3, kind: input, shape index: {}]
  %s4 = inlined_call_operand.hbm [shape: bf16[688,128], index: 4, kind: input, shape index: {}]
  %s5 = inlined_call_operand.vmem [shape: f32[8,128], index: 5, kind: input, shape index: {}]
  %s6 = inlined_call_operand.vmem [shape: f32[8,1], index: 6, kind: output, shape index: {}]
  %s7 = sld [smem:[#allocation0]]
  $region38: #{rnn_td3_critic.1} parent=0
    _
  %s9 = ssub.s32 1, %s7
  %s10 = scalar_select 0, %s9, %s7
  $region1: #{rnn_td3_critic.1} parent=0
    #allocation2 [shape = 'u8[176128]{0}', space=vmem, size = 0x2b000, scoped, tag = 'input window, operand 4, single buffered']
    #allocation3 [shape = 's32[1]{0}', space=sflag, size = 0x4, scoped, tag = 'scoped memory for rnn_td3_critic.1']
    %11 = vsyncpa [#allocation3], 0
    // Predicated region
    $region2: #{rnn_td3_critic.1} parent=1 // pred_check
      _
    $region3: #{rnn_td3_critic.1} parent=1 // pred_check_branch
      %13 = sbr.rel (0) target = $region5
    $region4: #{rnn_td3_critic.1} parent=1 // pred_region
      _
    $region5: #{rnn_td3_critic.1} parent=1 // pred_fallthru
      _
    // Predicated region
    $region6: #{rnn_td3_critic.1} parent=1 // pred_check
      _
    $region7: #{rnn_td3_critic.1} parent=1 // pred_check_branch
      %15 = sbr.rel (0) target = $region9
    $region8: #{rnn_td3_critic.1} parent=1 // pred_region
      _
    $region9: #{rnn_td3_critic.1} parent=1 // pred_fallthru
      _
    // Predicated region
    $region10: #{rnn_td3_critic.1} parent=1 // pred_check
      _
    $region11: #{rnn_td3_critic.1} parent=1 // pred_check_branch
      %17 = sbr.rel (0) target = $region13
    $region12: #{rnn_td3_critic.1} parent=1 // pred_region
      _
    $region13: #{rnn_td3_critic.1} parent=1 // pred_fallthru
      _
    // Predicated region
    $region14: #{rnn_td3_critic.1} parent=1 // pred_check
      _
    $region15: #{rnn_td3_critic.1} parent=1 // pred_check_branch
      %19 = sbr.rel (0) target = $region17
    $region16: #{rnn_td3_critic.1} parent=1 // pred_region
      _
    $region17: #{rnn_td3_critic.1} parent=1 // pred_fallthru
      _
    // Predicated region
    $region18: #{rnn_td3_critic.1} parent=1 // pred_check
      _
    $region19: #{rnn_td3_critic.1} parent=1 // pred_check_branch
      %21 = sbr.rel (0) target = $region21
    $region20: #{rnn_td3_critic.1} parent=1 // pred_region
      %s23 = ssub.s32 5504, 5504
      %24 = vsyncadd [#allocation3], %s23
      %s25 = sshll.u32 [#allocation2], 4
      %s26 = int_to_ptr.vmem [resolvable:$true] %s25
      %31 = dma.hbm_to_vmem [thread:$0]  %s4, 5504, %s26, [#allocation3], 64, 64, 4
    $region21: #{rnn_td3_critic.1} parent=1 // pred_fallthru
      _
    // Predicated region
    $region22: #{rnn_td3_critic.1} parent=1 // pred_check
      _
    $region23: #{rnn_td3_critic.1} parent=1 // pred_check_branch
      %33 = sbr.rel (0) target = $region25
    $region24: #{rnn_td3_critic.1} parent=1 // pred_region
      _
    $region25: #{rnn_td3_critic.1} parent=1 // pred_fallthru
      _
    // Predicated region
    $region26: #{rnn_td3_critic.1} parent=1 // pred_check
      _
    $region27: #{rnn_td3_critic.1} parent=1 // pred_check_branch
      %35 = sbr.rel (0) target = $region29
    $region28: #{rnn_td3_critic.1} parent=1 // pred_region
      %36 = dma.done [#allocation3], 5504
    $region29: #{rnn_td3_critic.1} parent=1 // pred_fallthru
      _
    %v38 = vld [vmem:[%s5] sm:$0x1]
    %v39 = vld [vmem:[%s5 + $0x1] sm:$0x1]
    %v40 = vld [vmem:[%s5 + $0x2] sm:$0x1]
    %v41 = vld [vmem:[%s5 + $0x3] sm:$0x1]
    %v42 = vld [vmem:[%s5 + $0x4] sm:$0x1]
    %v43 = vld [vmem:[%s5 + $0x5] sm:$0x1]
    %v44 = vld [vmem:[%s5 + $0x6] sm:$0x1]
    %v45 = vld [vmem:[%s1] sm:$0xff]
    %v46 = vpack.c.bf16 %v45, %v45
    %v47 = vld [vmem:[#allocation2 + $0x8] sm:$0xf]
    %v48 = vld [vmem:[#allocation2 + $0xc] sm:$0xf]
    %v49 = vld [vmem:[%s2] sm:$0xff]
    %v50 = vpack.c.bf16 %v49, %v49
    %v51 = vld [vmem:[#allocation2 + $0x10] sm:$0xf]
    %v52 = vld [vmem:[#allocation2 + $0x14] sm:$0xf]
    %v55 = vunpack.c.l.b16 %v51
    %v56 = vunpack.c.l.b16 %v52
    %v57 = vpack.c.b16 %v56, %v55
    %vm59 = vcmask 130048
    %v61 = vsel %vm59, %v50, 0
    %63 = vmatprep.subr.bf16.mxu0 0
    %64 = vmatpush1.bf16.msra.mxu0 %v57
    %65 = vmatprep.subr.bf16.mxu0 0
    %66 = vmatpush1.bf16.msra.mxu0 0
    %67 = vmatprep.subr.bf16.mxu0 0
    %68 = vmatpush1.bf16.msra.mxu0 0
    %69 = vmatprep.subr.bf16.mxu0 0
    %70 = vmatpush1.bf16.msra.mxu0 0
    %71 = vmatprep.subr.bf16.mxu0 0
    %72 = vmatpush1.bf16.msra.mxu0 0
    %73 = vmatprep.subr.bf16.mxu0 0
    %74 = vmatpush1.bf16.msra.mxu0 0
    %75 = vmatprep.subr.bf16.mxu0 0
    %76 = vmatpush1.bf16.msra.mxu0 0
    %77 = vmatprep.subr.bf16.mxu0 0
    %78 = vmatpush1.bf16.msra.mxu0 0
    %79 = vmatprep.subr.bf16.mxu0 0
    %80 = vmatpush1.bf16.msra.mxu0 0
    %81 = vmatprep.subr.bf16.mxu0 0
    %82 = vmatpush1.bf16.msra.mxu0 0
    %83 = vmatprep.subr.bf16.mxu0 0
    %84 = vmatpush1.bf16.msra.mxu0 0
    %85 = vmatprep.subr.bf16.mxu0 0
    %86 = vmatpush1.bf16.msra.mxu0 0
    %87 = vmatprep.subr.bf16.mxu0 0
    %88 = vmatpush1.bf16.msra.mxu0 0
    %89 = vmatprep.subr.bf16.mxu0 0
    %90 = vmatpush1.bf16.msra.mxu0 0
    %91 = vmatprep.subr.bf16.mxu0 0
    %92 = vmatpush1.bf16.msra.mxu0 0
    %93 = vmatprep.subr.bf16.mxu0 0
    %94 = vmatpush1.bf16.msra.mxu0 0
    %95 = vmatprep.mubr.bf16.mxu0 0
    %96 = vmatmul.mubr.bf16.gmra.mrb[0].mxu0 %v61
    %v97 = vpop.f32.mrb[0].mxu0
    %v98 = vadd.f32 0.0, %v97
    %v99 = vpop.f32.mrb[0].mxu0
    %v100 = vpop.f32.mrb[0].mxu0
    %v101 = vpop.f32.mrb[0].mxu0
    %102 = vdwg.mxu0
    %v105 = vunpack.c.l.b16 %v47
    %v106 = vunpack.c.l.b16 %v48
    %v107 = vpack.c.b16 %v106, %v105
    %v110 = vsel %vm59, %v46, 0
    %112 = vmatprep.subr.bf16.mxu0 0
    %113 = vmatpush1.bf16.msra.mxu0 %v107
    %114 = vmatprep.subr.bf16.mxu0 0
    %115 = vmatpush1.bf16.msra.mxu0 0
    %116 = vmatprep.subr.bf16.mxu0 0
    %117 = vmatpush1.bf16.msra.mxu0 0
    %118 = vmatprep.subr.bf16.mxu0 0
    %119 = vmatpush1.bf16.msra.mxu0 0
    %120 = vmatprep.subr.bf16.mxu0 0
    %121 = vmatpush1.bf16.msra.mxu0 0
    %122 = vmatprep.subr.bf16.mxu0 0
    %123 = vmatpush1.bf16.msra.mxu0 0
    %124 = vmatprep.subr.bf16.mxu0 0
    %125 = vmatpush1.bf16.msra.mxu0 0
    %126 = vmatprep.subr.bf16.mxu0 0
    %127 = vmatpush1.bf16.msra.mxu0 0
    %128 = vmatprep.subr.bf16.mxu0 0
    %129 = vmatpush1.bf16.msra.mxu0 0
    %130 = vmatprep.subr.bf16.mxu0 0
    %131 = vmatpush1.bf16.msra.mxu0 0
    %132 = vmatprep.subr.bf16.mxu0 0
    %133 = vmatpush1.bf16.msra.mxu0 0
    %134 = vmatprep.subr.bf16.mxu0 0
    %135 = vmatpush1.bf16.msra.mxu0 0
    %136 = vmatprep.subr.bf16.mxu0 0
    %137 = vmatpush1.bf16.msra.mxu0 0
    %138 = vmatprep.subr.bf16.mxu0 0
    %139 = vmatpush1.bf16.msra.mxu0 0
    %140 = vmatprep.subr.bf16.mxu0 0
    %141 = vmatpush1.bf16.msra.mxu0 0
    %142 = vmatprep.subr.bf16.mxu0 0
    %143 = vmatpush1.bf16.msra.mxu0 0
    %144 = vmatprep.mubr.bf16.mxu0 0
    %145 = vmatmul.mubr.bf16.gmra.mrb[0].mxu0 %v110
    %v146 = vpop.f32.mrb[0].mxu0
    %v147 = vadd.f32 %v98, %v146
    %v148 = vpop.f32.mrb[0].mxu0
    %v149 = vpop.f32.mrb[0].mxu0
    %v150 = vpop.f32.mrb[0].mxu0
    %151 = vdwg.mxu0
    %v152 = vlaneseq
    %v153 = vshrl.u32 %v152, 7
    %v154 = vsub.s32 0, %v153
    %v155 = vrot.slane %v40, %v154
    %v156 = vadd.f32 %v147, %v155
    %v157 = vmax.f32 %v156, 0.0
    %v158 = vpack.c.bf16 %v157, %v157
    %v159 = vld [vmem:[#allocation2 + $0x98] sm:$0xf]
    %v160 = vld [vmem:[#allocation2 + $0x9c] sm:$0xf]
    %v161 = vld [vmem:[#allocation2 + $0xa0] sm:$0xf]
    %v162 = vld [vmem:[#allocation2 + $0xa4] sm:$0xf]
    %v163 = vld [vmem:[#allocation2 + $0xa8] sm:$0xf]
    %v164 = vld [vmem:[#allocation2 + $0xac] sm:$0xf]
    %v165 = vld [vmem:[#allocation2 + $0xb0] sm:$0xf]
    %v166 = vld [vmem:[#allocation2 + $0xb4] sm:$0xf]
    %v167 = vld [vmem:[#allocation2 + $0xb8] sm:$0xf]
    %v168 = vld [vmem:[#allocation2 + $0xbc] sm:$0xf]
    %v169 = vld [vmem:[#allocation2 + $0xc0] sm:$0xf]
    %v170 = vld [vmem:[#allocation2 + $0xc4] sm:$0xf]
    %v171 = vld [vmem:[#allocation2 + $0xc8] sm:$0xf]
    %v172 = vld [vmem:[#allocation2 + $0xcc] sm:$0xf]
    %v173 = vld [vmem:[#allocation2 + $0xd0] sm:$0xf]
    %v174 = vld [vmem:[#allocation2 + $0xd4] sm:$0xf]
    %v175 = vlaneseq
    %v176 = vshrl.u32 %v175, 7
    %v177 = vsub.s32 0, %v176
    %v178 = vrot.slane %v41, %v177
    %v195 = vunpack.c.l.b16 %v159
    %v196 = vunpack.c.l.b16 %v160
    %v197 = vunpack.c.l.b16 %v161
    %v198 = vunpack.c.l.b16 %v162
    %v199 = vunpack.c.l.b16 %v163
    %v200 = vunpack.c.l.b16 %v164
    %v201 = vunpack.c.l.b16 %v165
    %v202 = vunpack.c.l.b16 %v166
    %v203 = vunpack.c.l.b16 %v167
    %v204 = vunpack.c.l.b16 %v168
    %v205 = vunpack.c.l.b16 %v169
    %v206 = vunpack.c.l.b16 %v170
    %v207 = vunpack.c.l.b16 %v171
    %v208 = vunpack.c.l.b16 %v172
    %v209 = vunpack.c.l.b16 %v173
    %v210 = vunpack.c.l.b16 %v174
    %v211 = vpack.c.b16 %v196, %v195
    %v212 = vpack.c.b16 %v198, %v197
    %v213 = vpack.c.b16 %v200, %v199
    %v214 = vpack.c.b16 %v202, %v201
    %v215 = vpack.c.b16 %v204, %v203
    %v216 = vpack.c.b16 %v206, %v205
    %v217 = vpack.c.b16 %v208, %v207
    %v218 = vpack.c.b16 %v210, %v209
    %227 = vmatprep.subr.bf16.mxu0 0
    %228 = vmatpush1.bf16.msra.mxu0 %v211
    %229 = vmatprep.subr.bf16.mxu0 0
    %230 = vmatpush1.bf16.msra.mxu0 %v212
    %231 = vmatprep.subr.bf16.mxu0 0
    %232 = vmatpush1.bf16.msra.mxu0 %v213
    %233 = vmatprep.subr.bf16.mxu0 0
    %234 = vmatpush1.bf16.msra.mxu0 %v214
    %235 = vmatprep.subr.bf16.mxu0 0
    %236 = vmatpush1.bf16.msra.mxu0 %v215
    %237 = vmatprep.subr.bf16.mxu0 0
    %238 = vmatpush1.bf16.msra.mxu0 %v216
    %239 = vmatprep.subr.bf16.mxu0 0
    %240 = vmatpush1.bf16.msra.mxu0 %v217
    %241 = vmatprep.subr.bf16.mxu0 0
    %242 = vmatpush1.bf16.msra.mxu0 %v218
    %243 = vmatprep.subr.bf16.mxu0 0
    %244 = vmatpush1.bf16.msra.mxu0 0
    %245 = vmatprep.subr.bf16.mxu0 0
    %246 = vmatpush1.bf16.msra.mxu0 0
    %247 = vmatprep.subr.bf16.mxu0 0
    %248 = vmatpush1.bf16.msra.mxu0 0
    %249 = vmatprep.subr.bf16.mxu0 0
    %250 = vmatpush1.bf16.msra.mxu0 0
    %251 = vmatprep.subr.bf16.mxu0 0
    %252 = vmatpush1.bf16.msra.mxu0 0
    %253 = vmatprep.subr.bf16.mxu0 0
    %254 = vmatpush1.bf16.msra.mxu0 0
    %255 = vmatprep.subr.bf16.mxu0 0
    %256 = vmatpush1.bf16.msra.mxu0 0
    %257 = vmatprep.subr.bf16.mxu0 0
    %258 = vmatpush1.bf16.msra.mxu0 0
    %259 = vmatprep.mubr.bf16.mxu0 0
    %260 = vmatmul.mubr.bf16.gmra.mrb[0].mxu0 %v158
    %v261 = vpop.f32.mrb[0].mxu0
    %v262 = vadd.f32 %v178, %v261
    %v263 = vpop.f32.mrb[0].mxu0
    %v264 = vpop.f32.mrb[0].mxu0
    %v265 = vpop.f32.mrb[0].mxu0
    %266 = vdwg.mxu0
    %v267 = vmax.f32 %v262, 0.0
    %v268 = vld [vmem:[%s0] sm:$0xff]
    %v269 = vld [vmem:[%s0 + $0x8] sm:$0xff]
    %v270 = vld [vmem:[%s0 + $0x10] sm:$0xff]
    %v271 = vld [vmem:[%s0 + $0x18] sm:$0xff]
    %v272 = vld [vmem:[%s0 + $0x20] sm:$0xff]
    %v273 = vld [vmem:[%s0 + $0x28] sm:$0xff]
    %v274 = vld [vmem:[%s0 + $0x30] sm:$0xff]
    %v275 = vld [vmem:[%s0 + $0x38] sm:$0xff]
    %v276 = vpack.c.bf16 %v269, %v268
    %v277 = vpack.c.bf16 %v271, %v270
    %v278 = vpack.c.bf16 %v273, %v272
    %v279 = vpack.c.bf16 %v275, %v274
    %v280 = vld [vmem:[#allocation2] sm:$0xf]
    %v281 = vld [vmem:[#allocation2 + $0x4] sm:$0xf]
    %v282 = vlaneseq
    %v283 = vshrl.u32 %v282, 7
    %v284 = vsub.s32 0, %v283
    %v285 = vrot.slane %v38, %v284
    %v288 = vunpack.c.l.b16 %v280
    %v289 = vunpack.c.l.b16 %v281
    %v290 = vpack.c.b16 %v289, %v288
    %v293 = vsel %vm59, %v276, 0
    %v296 = vsel %vm59, %v277, 0
    %v299 = vsel %vm59, %v278, 0
    %v302 = vsel %vm59, %v279, 0
    %304 = vmatprep.subr.bf16.mxu0 0
    %305 = vmatpush1.bf16.msra.mxu0 %v290
    %306 = vmatprep.subr.bf16.mxu0 0
    %307 = vmatpush1.bf16.msra.mxu0 0
    %308 = vmatprep.subr.bf16.mxu0 0
    %309 = vmatpush1.bf16.msra.mxu0 0
    %310 = vmatprep.subr.bf16.mxu0 0
    %311 = vmatpush1.bf16.msra.mxu0 0
    %312 = vmatprep.subr.bf16.mxu0 0
    %313 = vmatpush1.bf16.msra.mxu0 0
    %314 = vmatprep.subr.bf16.mxu0 0
    %315 = vmatpush1.bf16.msra.mxu0 0
    %316 = vmatprep.subr.bf16.mxu0 0
    %317 = vmatpush1.bf16.msra.mxu0 0
    %318 = vmatprep.subr.bf16.mxu0 0
    %319 = vmatpush1.bf16.msra.mxu0 0
    %320 = vmatprep.subr.bf16.mxu0 0
    %321 = vmatpush1.bf16.msra.mxu0 0
    %322 = vmatprep.subr.bf16.mxu0 0
    %323 = vmatpush1.bf16.msra.mxu0 0
    %324 = vmatprep.subr.bf16.mxu0 0
    %325 = vmatpush1.bf16.msra.mxu0 0
    %326 = vmatprep.subr.bf16.mxu0 0
    %327 = vmatpush1.bf16.msra.mxu0 0
    %328 = vmatprep.subr.bf16.mxu0 0
    %329 = vmatpush1.bf16.msra.mxu0 0
    %330 = vmatprep.subr.bf16.mxu0 0
    %331 = vmatpush1.bf16.msra.mxu0 0
    %332 = vmatprep.subr.bf16.mxu0 0
    %333 = vmatpush1.bf16.msra.mxu0 0
    %334 = vmatprep.subr.bf16.mxu0 0
    %335 = vmatpush1.bf16.msra.mxu0 0
    %336 = vmatprep.mubr.bf16.mxu0 0
    %337 = vmatmul.mubr.bf16.gmra.mrb[0].mxu0 %v293
    %v338 = vpop.f32.mrb[0].mxu0
    %v339 = vadd.f32 %v285, %v338
    %v340 = vpop.f32.mrb[0].mxu0
    %v341 = vpop.f32.mrb[0].mxu0
    %v342 = vadd.f32 %v285, %v341
    %v343 = vpop.f32.mrb[0].mxu0
    %344 = vmatprep.mubr.bf16.mxu0 0
    %345 = vmatmul.mubr.bf16.gmra.mrb[0].mxu0 %v296
    %v346 = vpop.f32.mrb[0].mxu0
    %v347 = vadd.f32 %v285, %v346
    %v348 = vpop.f32.mrb[0].mxu0
    %v349 = vpop.f32.mrb[0].mxu0
    %v350 = vadd.f32 %v285, %v349
    %v351 = vpop.f32.mrb[0].mxu0
    %352 = vmatprep.mubr.bf16.mxu0 0
    %353 = vmatmul.mubr.bf16.gmra.mrb[0].mxu0 %v299
    %v354 = vpop.f32.mrb[0].mxu0
    %v355 = vadd.f32 %v285, %v354
    %v356 = vpop.f32.mrb[0].mxu0
    %v357 = vpop.f32.mrb[0].mxu0
    %v358 = vadd.f32 %v285, %v357
    %v359 = vpop.f32.mrb[0].mxu0
    %360 = vmatprep.mubr.bf16.mxu0 0
    %361 = vmatmul.mubr.bf16.gmra.mrb[0].mxu0 %v302
    %v362 = vpop.f32.mrb[0].mxu0
    %v363 = vadd.f32 %v285, %v362
    %v364 = vpop.f32.mrb[0].mxu0
    %v365 = vpop.f32.mrb[0].mxu0
    %v366 = vadd.f32 %v285, %v365
    %v367 = vpop.f32.mrb[0].mxu0
    %368 = vdwg.mxu0
    %v369 = vmax.f32 %v339, 0.0
    %v370 = vmax.f32 %v342, 0.0
    %v371 = vmax.f32 %v347, 0.0
    %v372 = vmax.f32 %v350, 0.0
    %v373 = vmax.f32 %v355, 0.0
    %v374 = vmax.f32 %v358, 0.0
    %v375 = vmax.f32 %v363, 0.0
    %v376 = vmax.f32 %v366, 0.0
    %v377 = vpack.c.bf16 %v370, %v369
    %v378 = vpack.c.bf16 %v372, %v371
    %v379 = vpack.c.bf16 %v374, %v373
    %v380 = vpack.c.bf16 %v376, %v375
    %v381 = vld [vmem:[#allocation2 + $0x18] sm:$0xf]
    %v382 = vld [vmem:[#allocation2 + $0x1c] sm:$0xf]
    %v383 = vld [vmem:[#allocation2 + $0x20] sm:$0xf]
    %v384 = vld [vmem:[#allocation2 + $0x24] sm:$0xf]
    %v385 = vld [vmem:[#allocation2 + $0x28] sm:$0xf]
    %v386 = vld [vmem:[#allocation2 + $0x2c] sm:$0xf]
    %v387 = vld [vmem:[#allocation2 + $0x30] sm:$0xf]
    %v388 = vld [vmem:[#allocation2 + $0x34] sm:$0xf]
    %v389 = vld [vmem:[#allocation2 + $0x38] sm:$0xf]
    %v390 = vld [vmem:[#allocation2 + $0x3c] sm:$0xf]
    %v391 = vld [vmem:[#allocation2 + $0x40] sm:$0xf]
    %v392 = vld [vmem:[#allocation2 + $0x44] sm:$0xf]
    %v393 = vld [vmem:[#allocation2 + $0x48] sm:$0xf]
    %v394 = vld [vmem:[#allocation2 + $0x4c] sm:$0xf]
    %v395 = vld [vmem:[#allocation2 + $0x50] sm:$0xf]
    %v396 = vld [vmem:[#allocation2 + $0x54] sm:$0xf]
    %v397 = vlaneseq
    %v398 = vshrl.u32 %v397, 7
    %v399 = vsub.s32 0, %v398
    %v400 = vrot.slane %v39, %v399
    %v417 = vunpack.c.l.b16 %v381
    %v418 = vunpack.c.l.b16 %v382
    %v419 = vunpack.c.l.b16 %v383
    %v420 = vunpack.c.l.b16 %v384
    %v421 = vunpack.c.l.b16 %v385
    %v422 = vunpack.c.l.b16 %v386
    %v423 = vunpack.c.l.b16 %v387
    %v424 = vunpack.c.l.b16 %v388
    %v425 = vunpack.c.l.b16 %v389
    %v426 = vunpack.c.l.b16 %v390
    %v427 = vunpack.c.l.b16 %v391
    %v428 = vunpack.c.l.b16 %v392
    %v429 = vunpack.c.l.b16 %v393
    %v430 = vunpack.c.l.b16 %v394
    %v431 = vunpack.c.l.b16 %v395
    %v432 = vunpack.c.l.b16 %v396
    %v433 = vpack.c.b16 %v418, %v417
    %v434 = vpack.c.b16 %v420, %v419
    %v435 = vpack.c.b16 %v422, %v421
    %v436 = vpack.c.b16 %v424, %v423
    %v437 = vpack.c.b16 %v426, %v425
    %v438 = vpack.c.b16 %v428, %v427
    %v439 = vpack.c.b16 %v430, %v429
    %v440 = vpack.c.b16 %v432, %v431
    %449 = vmatprep.subr.bf16.mxu0 0
    %450 = vmatpush1.bf16.msra.mxu0 %v433
    %451 = vmatprep.subr.bf16.mxu0 0
    %452 = vmatpush1.bf16.msra.mxu0 %v434
    %453 = vmatprep.subr.bf16.mxu0 0
    %454 = vmatpush1.bf16.msra.mxu0 %v435
    %455 = vmatprep.subr.bf16.mxu0 0
    %456 = vmatpush1.bf16.msra.mxu0 %v436
    %457 = vmatprep.subr.bf16.mxu0 0
    %458 = vmatpush1.bf16.msra.mxu0 %v437
    %459 = vmatprep.subr.bf16.mxu0 0
    %460 = vmatpush1.bf16.msra.mxu0 %v438
    %461 = vmatprep.subr.bf16.mxu0 0
    %462 = vmatpush1.bf16.msra.mxu0 %v439
    %463 = vmatprep.subr.bf16.mxu0 0
    %464 = vmatpush1.bf16.msra.mxu0 %v440
    %465 = vmatprep.subr.bf16.mxu0 0
    %466 = vmatpush1.bf16.msra.mxu0 0
    %467 = vmatprep.subr.bf16.mxu0 0
    %468 = vmatpush1.bf16.msra.mxu0 0
    %469 = vmatprep.subr.bf16.mxu0 0
    %470 = vmatpush1.bf16.msra.mxu0 0
    %471 = vmatprep.subr.bf16.mxu0 0
    %472 = vmatpush1.bf16.msra.mxu0 0
    %473 = vmatprep.subr.bf16.mxu0 0
    %474 = vmatpush1.bf16.msra.mxu0 0
    %475 = vmatprep.subr.bf16.mxu0 0
    %476 = vmatpush1.bf16.msra.mxu0 0
    %477 = vmatprep.subr.bf16.mxu0 0
    %478 = vmatpush1.bf16.msra.mxu0 0
    %479 = vmatprep.subr.bf16.mxu0 0
    %480 = vmatpush1.bf16.msra.mxu0 0
    %481 = vmatprep.mubr.bf16.mxu0 0
    %482 = vmatmul.mubr.bf16.gmra.mrb[0].mxu0 %v377
    %v483 = vpop.f32.mrb[0].mxu0
    %v484 = vadd.f32 %v400, %v483
    %v485 = vpop.f32.mrb[0].mxu0
    %v486 = vpop.f32.mrb[0].mxu0
    %v487 = vadd.f32 %v400, %v486
    %v488 = vpop.f32.mrb[0].mxu0
    %489 = vmatprep.mubr.bf16.mxu0 0
    %490 = vmatmul.mubr.bf16.gmra.mrb[0].mxu0 %v378
    %v491 = vpop.f32.mrb[0].mxu0
    %v492 = vadd.f32 %v400, %v491
    %v493 = vpop.f32.mrb[0].mxu0
    %v494 = vpop.f32.mrb[0].mxu0
    %v495 = vadd.f32 %v400, %v494
    %v496 = vpop.f32.mrb[0].mxu0
    %497 = vmatprep.mubr.bf16.mxu0 0
    %498 = vmatmul.mubr.bf16.gmra.mrb[0].mxu0 %v379
    %v499 = vpop.f32.mrb[0].mxu0
    %v500 = vadd.f32 %v400, %v499
    %v501 = vpop.f32.mrb[0].mxu0
    %v502 = vpop.f32.mrb[0].mxu0
    %v503 = vadd.f32 %v400, %v502
    %v504 = vpop.f32.mrb[0].mxu0
    %505 = vmatprep.mubr.bf16.mxu0 0
    %506 = vmatmul.mubr.bf16.gmra.mrb[0].mxu0 %v380
    %v507 = vpop.f32.mrb[0].mxu0
    %v508 = vadd.f32 %v400, %v507
    %v509 = vpop.f32.mrb[0].mxu0
    %v510 = vpop.f32.mrb[0].mxu0
    %v511 = vadd.f32 %v400, %v510
    %v512 = vpop.f32.mrb[0].mxu0
    %513 = vdwg.mxu0
    %v514 = vld [vmem:[%s3] sm:$0xff]
    %v515 = vsub.s32 %v514, 1
    %v516 = vtanh.pop %v484
    %vm517 = vcmp.eq.s32.totalorder %v515, 0
    %v518 = vsel %vm517, 1, 0
    %519 = vset.pattern.permute.xlu0 0
    %520 = vperm.xlu0 %519, %v518
    %v521 = vpop.permute.xlu0 %520
    %vm522 = vcmp.eq.s32.totalorder %v521, 1
    %v523 = vsel %vm522, %v516, 0.0
    %v524 = vpack.c.bf16 %v516, %v516
    %v525 = vld [vmem:[#allocation2 + $0x58] sm:$0xf]
    %v526 = vld [vmem:[#allocation2 + $0x5c] sm:$0xf]
    %v527 = vld [vmem:[#allocation2 + $0x60] sm:$0xf]
    %v528 = vld [vmem:[#allocation2 + $0x64] sm:$0xf]
    %v529 = vld [vmem:[#allocation2 + $0x68] sm:$0xf]
    %v530 = vld [vmem:[#allocation2 + $0x6c] sm:$0xf]
    %v531 = vld [vmem:[#allocation2 + $0x70] sm:$0xf]
    %v532 = vld [vmem:[#allocation2 + $0x74] sm:$0xf]
    %v533 = vld [vmem:[#allocation2 + $0x78] sm:$0xf]
    %v534 = vld [vmem:[#allocation2 + $0x7c] sm:$0xf]
    %v535 = vld [vmem:[#allocation2 + $0x80] sm:$0xf]
    %v536 = vld [vmem:[#allocation2 + $0x84] sm:$0xf]
    %v537 = vld [vmem:[#allocation2 + $0x88] sm:$0xf]
    %v538 = vld [vmem:[#allocation2 + $0x8c] sm:$0xf]
    %v539 = vld [vmem:[#allocation2 + $0x90] sm:$0xf]
    %v540 = vld [vmem:[#allocation2 + $0x94] sm:$0xf]
    %v557 = vunpack.c.l.b16 %v525
    %v558 = vunpack.c.l.b16 %v526
    %v559 = vunpack.c.l.b16 %v527
    %v560 = vunpack.c.l.b16 %v528
    %v561 = vunpack.c.l.b16 %v529
    %v562 = vunpack.c.l.b16 %v530
    %v563 = vunpack.c.l.b16 %v531
    %v564 = vunpack.c.l.b16 %v532
    %v565 = vunpack.c.l.b16 %v533
    %v566 = vunpack.c.l.b16 %v534
    %v567 = vunpack.c.l.b16 %v535
    %v568 = vunpack.c.l.b16 %v536
    %v569 = vunpack.c.l.b16 %v537
    %v570 = vunpack.c.l.b16 %v538
    %v571 = vunpack.c.l.b16 %v539
    %v572 = vunpack.c.l.b16 %v540
    %v573 = vpack.c.b16 %v558, %v557
    %v574 = vpack.c.b16 %v560, %v559
    %v575 = vpack.c.b16 %v562, %v561
    %v576 = vpack.c.b16 %v564, %v563
    %v577 = vpack.c.b16 %v566, %v565
    %v578 = vpack.c.b16 %v568, %v567
    %v579 = vpack.c.b16 %v570, %v569
    %v580 = vpack.c.b16 %v572, %v571
    %589 = vmatprep.subr.bf16.mxu0 0
    %590 = vmatpush1.bf16.msra.mxu0 %v573
    %591 = vmatprep.subr.bf16.mxu0 0
    %592 = vmatpush1.bf16.msra.mxu0 %v574
    %593 = vmatprep.subr.bf16.mxu0 0
    %594 = vmatpush1.bf16.msra.mxu0 %v575
    %595 = vmatprep.subr.bf16.mxu0 0
    %596 = vmatpush1.bf16.msra.mxu0 %v576
    %597 = vmatprep.subr.bf16.mxu0 0
    %598 = vmatpush1.bf16.msra.mxu0 %v577
    %599 = vmatprep.subr.bf16.mxu0 0
    %600 = vmatpush1.bf16.msra.mxu0 %v578
    %601 = vmatprep.subr.bf16.mxu0 0
    %602 = vmatpush1.bf16.msra.mxu0 %v579
    %603 = vmatprep.subr.bf16.mxu0 0
    %604 = vmatpush1.bf16.msra.mxu0 %v580
    %605 = vmatprep.subr.bf16.mxu0 0
    %606 = vmatpush1.bf16.msra.mxu0 0
    %607 = vmatprep.subr.bf16.mxu0 0
    %608 = vmatpush1.bf16.msra.mxu0 0
    %609 = vmatprep.subr.bf16.mxu0 0
    %610 = vmatpush1.bf16.msra.mxu0 0
    %611 = vmatprep.subr.bf16.mxu0 0
    %612 = vmatpush1.bf16.msra.mxu0 0
    %613 = vmatprep.subr.bf16.mxu0 0
    %614 = vmatpush1.bf16.msra.mxu0 0
    %615 = vmatprep.subr.bf16.mxu0 0
    %616 = vmatpush1.bf16.msra.mxu0 0
    %617 = vmatprep.subr.bf16.mxu0 0
    %618 = vmatpush1.bf16.msra.mxu0 0
    %619 = vmatprep.subr.bf16.mxu0 0
    %620 = vmatpush1.bf16.msra.mxu0 0
    %621 = vmatprep.mubr.bf16.mxu0 0
    %622 = vmatmul.mubr.bf16.gmra.mrb[0].mxu0 %v524
    %v623 = vpop.f32.mrb[0].mxu0
    %v624 = vadd.f32 0.0, %v623
    %v625 = vpop.f32.mrb[0].mxu0
    %v626 = vpop.f32.mrb[0].mxu0
    %v627 = vpop.f32.mrb[0].mxu0
    %628 = vdwg.mxu0
    %v629 = vadd.f32 %v487, %v624
    %v630 = vtanh.pop %v629
    %vm631 = vcmp.eq.s32.totalorder %v515, 1
    %v632 = vsel %vm631, 1, 0
    %633 = vset.pattern.permute.xlu0 0
    %634 = vperm.xlu0 %633, %v632
    %v635 = vpop.permute.xlu0 %634
    %vm636 = vcmp.eq.s32.totalorder %v635, 1
    %v637 = vsel %vm636, %v630, %v523
    %v638 = vpack.c.bf16 %v630, %v630
    %639 = vmatprep.subr.bf16.mxu0 0
    %640 = vmatpush1.bf16.msra.mxu0 %v573
    %641 = vmatprep.subr.bf16.mxu0 0
    %642 = vmatpush1.bf16.msra.mxu0 %v574
    %643 = vmatprep.subr.bf16.mxu0 0
    %644 = vmatpush1.bf16.msra.mxu0 %v575
    %645 = vmatprep.subr.bf16.mxu0 0
    %646 = vmatpush1.bf16.msra.mxu0 %v576
    %647 = vmatprep.subr.bf16.mxu0 0
    %648 = vmatpush1.bf16.msra.mxu0 %v577
    %649 = vmatprep.subr.bf16.mxu0 0
    %650 = vmatpush1.bf16.msra.mxu0 %v578
    %651 = vmatprep.subr.bf16.mxu0 0
    %652 = vmatpush1.bf16.msra.mxu0 %v579
    %653 = vmatprep.subr.bf16.mxu0 0
    %654 = vmatpush1.bf16.msra.mxu0 %v580
    %655 = vmatprep.subr.bf16.mxu0 0
    %656 = vmatpush1.bf16.msra.mxu0 0
    %657 = vmatprep.subr.bf16.mxu0 0
    %658 = vmatpush1.bf16.msra.mxu0 0
    %659 = vmatprep.subr.bf16.mxu0 0
    %660 = vmatpush1.bf16.msra.mxu0 0
    %661 = vmatprep.subr.bf16.mxu0 0
    %662 = vmatpush1.bf16.msra.mxu0 0
    %663 = vmatprep.subr.bf16.mxu0 0
    %664 = vmatpush1.bf16.msra.mxu0 0
    %665 = vmatprep.subr.bf16.mxu0 0
    %666 = vmatpush1.bf16.msra.mxu0 0
    %667 = vmatprep.subr.bf16.mxu0 0
    %668 = vmatpush1.bf16.msra.mxu0 0
    %669 = vmatprep.subr.bf16.mxu0 0
    %670 = vmatpush1.bf16.msra.mxu0 0
    %671 = vmatprep.mubr.bf16.mxu0 0
    %672 = vmatmul.mubr.bf16.gmra.mrb[0].mxu0 %v638
    %v673 = vpop.f32.mrb[0].mxu0
    %v674 = vadd.f32 0.0, %v673
    %v675 = vpop.f32.mrb[0].mxu0
    %v676 = vpop.f32.mrb[0].mxu0
    %v677 = vpop.f32.mrb[0].mxu0
    %678 = vdwg.mxu0
    %v679 = vadd.f32 %v492, %v674
    %v680 = vtanh.pop %v679
    %vm681 = vcmp.eq.s32.totalorder %v515, 2
    %v682 = vsel %vm681, 1, 0
    %683 = vset.pattern.permute.xlu0 0
    %684 = vperm.xlu0 %683, %v682
    %v685 = vpop.permute.xlu0 %684
    %vm686 = vcmp.eq.s32.totalorder %v685, 1
    %v687 = vsel %vm686, %v680, %v637
    %v688 = vpack.c.bf16 %v680, %v680
    %689 = vmatprep.subr.bf16.mxu0 0
    %690 = vmatpush1.bf16.msra.mxu0 %v573
    %691 = vmatprep.subr.bf16.mxu0 0
    %692 = vmatpush1.bf16.msra.mxu0 %v574
    %693 = vmatprep.subr.bf16.mxu0 0
    %694 = vmatpush1.bf16.msra.mxu0 %v575
    %695 = vmatprep.subr.bf16.mxu0 0
    %696 = vmatpush1.bf16.msra.mxu0 %v576
    %697 = vmatprep.subr.bf16.mxu0 0
    %698 = vmatpush1.bf16.msra.mxu0 %v577
    %699 = vmatprep.subr.bf16.mxu0 0
    %700 = vmatpush1.bf16.msra.mxu0 %v578
    %701 = vmatprep.subr.bf16.mxu0 0
    %702 = vmatpush1.bf16.msra.mxu0 %v579
    %703 = vmatprep.subr.bf16.mxu0 0
    %704 = vmatpush1.bf16.msra.mxu0 %v580
    %705 = vmatprep.subr.bf16.mxu0 0
    %706 = vmatpush1.bf16.msra.mxu0 0
    %707 = vmatprep.subr.bf16.mxu0 0
    %708 = vmatpush1.bf16.msra.mxu0 0
    %709 = vmatprep.subr.bf16.mxu0 0
    %710 = vmatpush1.bf16.msra.mxu0 0
    %711 = vmatprep.subr.bf16.mxu0 0
    %712 = vmatpush1.bf16.msra.mxu0 0
    %713 = vmatprep.subr.bf16.mxu0 0
    %714 = vmatpush1.bf16.msra.mxu0 0
    %715 = vmatprep.subr.bf16.mxu0 0
    %716 = vmatpush1.bf16.msra.mxu0 0
    %717 = vmatprep.subr.bf16.mxu0 0
    %718 = vmatpush1.bf16.msra.mxu0 0
    %719 = vmatprep.subr.bf16.mxu0 0
    %720 = vmatpush1.bf16.msra.mxu0 0
    %721 = vmatprep.mubr.bf16.mxu0 0
    %722 = vmatmul.mubr.bf16.gmra.mrb[0].mxu0 %v688
    %v723 = vpop.f32.mrb[0].mxu0
    %v724 = vadd.f32 0.0, %v723
    %v725 = vpop.f32.mrb[0].mxu0
    %v726 = vpop.f32.mrb[0].mxu0
    %v727 = vpop.f32.mrb[0].mxu0
    %728 = vdwg.mxu0
    %v729 = vadd.f32 %v495, %v724
    %v730 = vtanh.pop %v729
    %vm731 = vcmp.eq.s32.totalorder %v515, 3
    %v732 = vsel %vm731, 1, 0
    %733 = vset.pattern.permute.xlu0 0
    %734 = vperm.xlu0 %733, %v732
    %v735 = vpop.permute.xlu0 %734
    %vm736 = vcmp.eq.s32.totalorder %v735, 1
    %v737 = vsel %vm736, %v730, %v687
    %v738 = vpack.c.bf16 %v730, %v730
    %739 = vmatprep.subr.bf16.mxu0 0
    %740 = vmatpush1.bf16.msra.mxu0 %v573
    %741 = vmatprep.subr.bf16.mxu0 0
    %742 = vmatpush1.bf16.msra.mxu0 %v574
    %743 = vmatprep.subr.bf16.mxu0 0
    %744 = vmatpush1.bf16.msra.mxu0 %v575
    %745 = vmatprep.subr.bf16.mxu0 0
    %746 = vmatpush1.bf16.msra.mxu0 %v576
    %747 = vmatprep.subr.bf16.mxu0 0
    %748 = vmatpush1.bf16.msra.mxu0 %v577
    %749 = vmatprep.subr.bf16.mxu0 0
    %750 = vmatpush1.bf16.msra.mxu0 %v578
    %751 = vmatprep.subr.bf16.mxu0 0
    %752 = vmatpush1.bf16.msra.mxu0 %v579
    %753 = vmatprep.subr.bf16.mxu0 0
    %754 = vmatpush1.bf16.msra.mxu0 %v580
    %755 = vmatprep.subr.bf16.mxu0 0
    %756 = vmatpush1.bf16.msra.mxu0 0
    %757 = vmatprep.subr.bf16.mxu0 0
    %758 = vmatpush1.bf16.msra.mxu0 0
    %759 = vmatprep.subr.bf16.mxu0 0
    %760 = vmatpush1.bf16.msra.mxu0 0
    %761 = vmatprep.subr.bf16.mxu0 0
    %762 = vmatpush1.bf16.msra.mxu0 0
    %763 = vmatprep.subr.bf16.mxu0 0
    %764 = vmatpush1.bf16.msra.mxu0 0
    %765 = vmatprep.subr.bf16.mxu0 0
    %766 = vmatpush1.bf16.msra.mxu0 0
    %767 = vmatprep.subr.bf16.mxu0 0
    %768 = vmatpush1.bf16.msra.mxu0 0
    %769 = vmatprep.subr.bf16.mxu0 0
    %770 = vmatpush1.bf16.msra.mxu0 0
    %771 = vmatprep.mubr.bf16.mxu0 0
    %772 = vmatmul.mubr.bf16.gmra.mrb[0].mxu0 %v738
    %v773 = vpop.f32.mrb[0].mxu0
    %v774 = vadd.f32 0.0, %v773
    %v775 = vpop.f32.mrb[0].mxu0
    %v776 = vpop.f32.mrb[0].mxu0
    %v777 = vpop.f32.mrb[0].mxu0
    %778 = vdwg.mxu0
    %v779 = vadd.f32 %v500, %v774
    %v780 = vtanh.pop %v779
    %vm781 = vcmp.eq.s32.totalorder %v515, 4
    %v782 = vsel %vm781, 1, 0
    %783 = vset.pattern.permute.xlu0 0
    %784 = vperm.xlu0 %783, %v782
    %v785 = vpop.permute.xlu0 %784
    %vm786 = vcmp.eq.s32.totalorder %v785, 1
    %v787 = vsel %vm786, %v780, %v737
    %v788 = vpack.c.bf16 %v780, %v780
    %789 = vmatprep.subr.bf16.mxu0 0
    %790 = vmatpush1.bf16.msra.mxu0 %v573
    %791 = vmatprep.subr.bf16.mxu0 0
    %792 = vmatpush1.bf16.msra.mxu0 %v574
    %793 = vmatprep.subr.bf16.mxu0 0
    %794 = vmatpush1.bf16.msra.mxu0 %v575
    %795 = vmatprep.subr.bf16.mxu0 0
    %796 = vmatpush1.bf16.msra.mxu0 %v576
    %797 = vmatprep.subr.bf16.mxu0 0
    %798 = vmatpush1.bf16.msra.mxu0 %v577
    %799 = vmatprep.subr.bf16.mxu0 0
    %800 = vmatpush1.bf16.msra.mxu0 %v578
    %801 = vmatprep.subr.bf16.mxu0 0
    %802 = vmatpush1.bf16.msra.mxu0 %v579
    %803 = vmatprep.subr.bf16.mxu0 0
    %804 = vmatpush1.bf16.msra.mxu0 %v580
    %805 = vmatprep.subr.bf16.mxu0 0
    %806 = vmatpush1.bf16.msra.mxu0 0
    %807 = vmatprep.subr.bf16.mxu0 0
    %808 = vmatpush1.bf16.msra.mxu0 0
    %809 = vmatprep.subr.bf16.mxu0 0
    %810 = vmatpush1.bf16.msra.mxu0 0
    %811 = vmatprep.subr.bf16.mxu0 0
    %812 = vmatpush1.bf16.msra.mxu0 0
    %813 = vmatprep.subr.bf16.mxu0 0
    %814 = vmatpush1.bf16.msra.mxu0 0
    %815 = vmatprep.subr.bf16.mxu0 0
    %816 = vmatpush1.bf16.msra.mxu0 0
    %817 = vmatprep.subr.bf16.mxu0 0
    %818 = vmatpush1.bf16.msra.mxu0 0
    %819 = vmatprep.subr.bf16.mxu0 0
    %820 = vmatpush1.bf16.msra.mxu0 0
    %821 = vmatprep.mubr.bf16.mxu0 0
    %822 = vmatmul.mubr.bf16.gmra.mrb[0].mxu0 %v788
    %v823 = vpop.f32.mrb[0].mxu0
    %v824 = vadd.f32 0.0, %v823
    %v825 = vpop.f32.mrb[0].mxu0
    %v826 = vpop.f32.mrb[0].mxu0
    %v827 = vpop.f32.mrb[0].mxu0
    %828 = vdwg.mxu0
    %v829 = vadd.f32 %v503, %v824
    %v830 = vtanh.pop %v829
    %vm831 = vcmp.eq.s32.totalorder %v515, 5
    %v832 = vsel %vm831, 1, 0
    %833 = vset.pattern.permute.xlu0 0
    %834 = vperm.xlu0 %833, %v832
    %v835 = vpop.permute.xlu0 %834
    %vm836 = vcmp.eq.s32.totalorder %v835, 1
    %v837 = vsel %vm836, %v830, %v787
    %v838 = vpack.c.bf16 %v830, %v830
    %839 = vmatprep.subr.bf16.mxu0 0
    %840 = vmatpush1.bf16.msra.mxu0 %v573
    %841 = vmatprep.subr.bf16.mxu0 0
    %842 = vmatpush1.bf16.msra.mxu0 %v574
    %843 = vmatprep.subr.bf16.mxu0 0
    %844 = vmatpush1.bf16.msra.mxu0 %v575
    %845 = vmatprep.subr.bf16.mxu0 0
    %846 = vmatpush1.bf16.msra.mxu0 %v576
    %847 = vmatprep.subr.bf16.mxu0 0
    %848 = vmatpush1.bf16.msra.mxu0 %v577
    %849 = vmatprep.subr.bf16.mxu0 0
    %850 = vmatpush1.bf16.msra.mxu0 %v578
    %851 = vmatprep.subr.bf16.mxu0 0
    %852 = vmatpush1.bf16.msra.mxu0 %v579
    %853 = vmatprep.subr.bf16.mxu0 0
    %854 = vmatpush1.bf16.msra.mxu0 %v580
    %855 = vmatprep.subr.bf16.mxu0 0
    %856 = vmatpush1.bf16.msra.mxu0 0
    %857 = vmatprep.subr.bf16.mxu0 0
    %858 = vmatpush1.bf16.msra.mxu0 0
    %859 = vmatprep.subr.bf16.mxu0 0
    %860 = vmatpush1.bf16.msra.mxu0 0
    %861 = vmatprep.subr.bf16.mxu0 0
    %862 = vmatpush1.bf16.msra.mxu0 0
    %863 = vmatprep.subr.bf16.mxu0 0
    %864 = vmatpush1.bf16.msra.mxu0 0
    %865 = vmatprep.subr.bf16.mxu0 0
    %866 = vmatpush1.bf16.msra.mxu0 0
    %867 = vmatprep.subr.bf16.mxu0 0
    %868 = vmatpush1.bf16.msra.mxu0 0
    %869 = vmatprep.subr.bf16.mxu0 0
    %870 = vmatpush1.bf16.msra.mxu0 0
    %871 = vmatprep.mubr.bf16.mxu0 0
    %872 = vmatmul.mubr.bf16.gmra.mrb[0].mxu0 %v838
    %v873 = vpop.f32.mrb[0].mxu0
    %v874 = vadd.f32 0.0, %v873
    %v875 = vpop.f32.mrb[0].mxu0
    %v876 = vpop.f32.mrb[0].mxu0
    %v877 = vpop.f32.mrb[0].mxu0
    %878 = vdwg.mxu0
    %v879 = vadd.f32 %v508, %v874
    %v880 = vtanh.pop %v879
    %vm881 = vcmp.eq.s32.totalorder %v515, 6
    %v882 = vsel %vm881, 1, 0
    %883 = vset.pattern.permute.xlu0 0
    %884 = vperm.xlu0 %883, %v882
    %v885 = vpop.permute.xlu0 %884
    %vm886 = vcmp.eq.s32.totalorder %v885, 1
    %v887 = vsel %vm886, %v880, %v837
    %v888 = vpack.c.bf16 %v880, %v880
    %889 = vmatprep.subr.bf16.mxu0 0
    %890 = vmatpush1.bf16.msra.mxu0 %v573
    %891 = vmatprep.subr.bf16.mxu0 0
    %892 = vmatpush1.bf16.msra.mxu0 %v574
    %893 = vmatprep.subr.bf16.mxu0 0
    %894 = vmatpush1.bf16.msra.mxu0 %v575
    %895 = vmatprep.subr.bf16.mxu0 0
    %896 = vmatpush1.bf16.msra.mxu0 %v576
    %897 = vmatprep.subr.bf16.mxu0 0
    %898 = vmatpush1.bf16.msra.mxu0 %v577
    %899 = vmatprep.subr.bf16.mxu0 0
    %900 = vmatpush1.bf16.msra.mxu0 %v578
    %901 = vmatprep.subr.bf16.mxu0 0
    %902 = vmatpush1.bf16.msra.mxu0 %v579
    %903 = vmatprep.subr.bf16.mxu0 0
    %904 = vmatpush1.bf16.msra.mxu0 %v580
    %905 = vmatprep.subr.bf16.mxu0 0
    %906 = vmatpush1.bf16.msra.mxu0 0
    %907 = vmatprep.subr.bf16.mxu0 0
    %908 = vmatpush1.bf16.msra.mxu0 0
    %909 = vmatprep.subr.bf16.mxu0 0
    %910 = vmatpush1.bf16.msra.mxu0 0
    %911 = vmatprep.subr.bf16.mxu0 0
    %912 = vmatpush1.bf16.msra.mxu0 0
    %913 = vmatprep.subr.bf16.mxu0 0
    %914 = vmatpush1.bf16.msra.mxu0 0
    %915 = vmatprep.subr.bf16.mxu0 0
    %916 = vmatpush1.bf16.msra.mxu0 0
    %917 = vmatprep.subr.bf16.mxu0 0
    %918 = vmatpush1.bf16.msra.mxu0 0
    %919 = vmatprep.subr.bf16.mxu0 0
    %920 = vmatpush1.bf16.msra.mxu0 0
    %921 = vmatprep.mubr.bf16.mxu0 0
    %922 = vmatmul.mubr.bf16.gmra.mrb[0].mxu0 %v888
    %v923 = vpop.f32.mrb[0].mxu0
    %v924 = vadd.f32 0.0, %v923
    %v925 = vpop.f32.mrb[0].mxu0
    %v926 = vpop.f32.mrb[0].mxu0
    %v927 = vpop.f32.mrb[0].mxu0
    %928 = vdwg.mxu0
    %v929 = vadd.f32 %v511, %v924
    %v930 = vtanh.pop %v929
    %vm931 = vcmp.eq.s32.totalorder %v515, 7
    %v932 = vsel %vm931, 1, 0
    %933 = vset.pattern.permute.xlu0 0
    %934 = vperm.xlu0 %933, %v932
    %v935 = vpop.permute.xlu0 %934
    %vm936 = vcmp.eq.s32.totalorder %v935, 1
    %v937 = vsel %vm936, %v930, %v887
    %v938 = vpack.c.bf16 %v937, %v937
    %v939 = vld [vmem:[#allocation2 + $0xd8] sm:$0xf]
    %v940 = vld [vmem:[#allocation2 + $0xdc] sm:$0xf]
    %v941 = vld [vmem:[#allocation2 + $0xe0] sm:$0xf]
    %v942 = vld [vmem:[#allocation2 + $0xe4] sm:$0xf]
    %v943 = vld [vmem:[#allocation2 + $0xe8] sm:$0xf]
    %v944 = vld [vmem:[#allocation2 + $0xec] sm:$0xf]
    %v945 = vld [vmem:[#allocation2 + $0xf0] sm:$0xf]
    %v946 = vld [vmem:[#allocation2 + $0xf4] sm:$0xf]
    %v947 = vld [vmem:[#allocation2 + $0xf8] sm:$0xf]
    %v948 = vld [vmem:[#allocation2 + $0xfc] sm:$0xf]
    %v949 = vld [vmem:[#allocation2 + $0x100] sm:$0xf]
    %v950 = vld [vmem:[#allocation2 + $0x104] sm:$0xf]
    %v951 = vld [vmem:[#allocation2 + $0x108] sm:$0xf]
    %v952 = vld [vmem:[#allocation2 + $0x10c] sm:$0xf]
    %v953 = vld [vmem:[#allocation2 + $0x110] sm:$0xf]
    %v954 = vld [vmem:[#allocation2 + $0x114] sm:$0xf]
    %v955 = vpack.c.bf16 %v267, %v267
    %v956 = vld [vmem:[#allocation2 + $0x118] sm:$0xf]
    %v957 = vld [vmem:[#allocation2 + $0x11c] sm:$0xf]
    %v958 = vld [vmem:[#allocation2 + $0x120] sm:$0xf]
    %v959 = vld [vmem:[#allocation2 + $0x124] sm:$0xf]
    %v960 = vld [vmem:[#allocation2 + $0x128] sm:$0xf]
    %v961 = vld [vmem:[#allocation2 + $0x12c] sm:$0xf]
    %v962 = vld [vmem:[#allocation2 + $0x130] sm:$0xf]
    %v963 = vld [vmem:[#allocation2 + $0x134] sm:$0xf]
    %v964 = vld [vmem:[#allocation2 + $0x138] sm:$0xf]
    %v965 = vld [vmem:[#allocation2 + $0x13c] sm:$0xf]
    %v966 = vld [vmem:[#allocation2 + $0x140] sm:$0xf]
    %v967 = vld [vmem:[#allocation2 + $0x144] sm:$0xf]
    %v968 = vld [vmem:[#allocation2 + $0x148] sm:$0xf]
    %v969 = vld [vmem:[#allocation2 + $0x14c] sm:$0xf]
    %v970 = vld [vmem:[#allocation2 + $0x150] sm:$0xf]
    %v971 = vld [vmem:[#allocation2 + $0x154] sm:$0xf]
    %v988 = vunpack.c.l.b16 %v956
    %v989 = vunpack.c.l.b16 %v957
    %v990 = vunpack.c.l.b16 %v958
    %v991 = vunpack.c.l.b16 %v959
    %v992 = vunpack.c.l.b16 %v960
    %v993 = vunpack.c.l.b16 %v961
    %v994 = vunpack.c.l.b16 %v962
    %v995 = vunpack.c.l.b16 %v963
    %v996 = vunpack.c.l.b16 %v964
    %v997 = vunpack.c.l.b16 %v965
    %v998 = vunpack.c.l.b16 %v966
    %v999 = vunpack.c.l.b16 %v967
    %v1000 = vunpack.c.l.b16 %v968
    %v1001 = vunpack.c.l.b16 %v969
    %v1002 = vunpack.c.l.b16 %v970
    %v1003 = vunpack.c.l.b16 %v971
    %v1004 = vpack.c.b16 %v989, %v988
    %v1005 = vpack.c.b16 %v991, %v990
    %v1006 = vpack.c.b16 %v993, %v992
    %v1007 = vpack.c.b16 %v995, %v994
    %v1008 = vpack.c.b16 %v997, %v996
    %v1009 = vpack.c.b16 %v999, %v998
    %v1010 = vpack.c.b16 %v1001, %v1000
    %v1011 = vpack.c.b16 %v1003, %v1002
    %1020 = vmatprep.subr.bf16.mxu0 0
    %1021 = vmatpush1.bf16.msra.mxu0 %v1004
    %1022 = vmatprep.subr.bf16.mxu0 0
    %1023 = vmatpush1.bf16.msra.mxu0 %v1005
    %1024 = vmatprep.subr.bf16.mxu0 0
    %1025 = vmatpush1.bf16.msra.mxu0 %v1006
    %1026 = vmatprep.subr.bf16.mxu0 0
    %1027 = vmatpush1.bf16.msra.mxu0 %v1007
    %1028 = vmatprep.subr.bf16.mxu0 0
    %1029 = vmatpush1.bf16.msra.mxu0 %v1008
    %1030 = vmatprep.subr.bf16.mxu0 0
    %1031 = vmatpush1.bf16.msra.mxu0 %v1009
    %1032 = vmatprep.subr.bf16.mxu0 0
    %1033 = vmatpush1.bf16.msra.mxu0 %v1010
    %1034 = vmatprep.subr.bf16.mxu0 0
    %1035 = vmatpush1.bf16.msra.mxu0 %v1011
    %1036 = vmatprep.subr.bf16.mxu0 0
    %1037 = vmatpush1.bf16.msra.mxu0 0
    %1038 = vmatprep.subr.bf16.mxu0 0
    %1039 = vmatpush1.bf16.msra.mxu0 0
    %1040 = vmatprep.subr.bf16.mxu0 0
    %1041 = vmatpush1.bf16.msra.mxu0 0
    %1042 = vmatprep.subr.bf16.mxu0 0
    %1043 = vmatpush1.bf16.msra.mxu0 0
    %1044 = vmatprep.subr.bf16.mxu0 0
    %1045 = vmatpush1.bf16.msra.mxu0 0
    %1046 = vmatprep.subr.bf16.mxu0 0
    %1047 = vmatpush1.bf16.msra.mxu0 0
    %1048 = vmatprep.subr.bf16.mxu0 0
    %1049 = vmatpush1.bf16.msra.mxu0 0
    %1050 = vmatprep.subr.bf16.mxu0 0
    %1051 = vmatpush1.bf16.msra.mxu0 0
    %1052 = vmatprep.mubr.bf16.mxu0 0
    %1053 = vmatmul.mubr.bf16.gmra.mrb[0].mxu0 %v955
    %v1054 = vpop.f32.mrb[0].mxu0
    %v1055 = vadd.f32 0.0, %v1054
    %v1056 = vpop.f32.mrb[0].mxu0
    %v1057 = vpop.f32.mrb[0].mxu0
    %v1058 = vpop.f32.mrb[0].mxu0
    %1059 = vdwg.mxu0
    %v1076 = vunpack.c.l.b16 %v939
    %v1077 = vunpack.c.l.b16 %v940
    %v1078 = vunpack.c.l.b16 %v941
    %v1079 = vunpack.c.l.b16 %v942
    %v1080 = vunpack.c.l.b16 %v943
    %v1081 = vunpack.c.l.b16 %v944
    %v1082 = vunpack.c.l.b16 %v945
    %v1083 = vunpack.c.l.b16 %v946
    %v1084 = vunpack.c.l.b16 %v947
    %v1085 = vunpack.c.l.b16 %v948
    %v1086 = vunpack.c.l.b16 %v949
    %v1087 = vunpack.c.l.b16 %v950
    %v1088 = vunpack.c.l.b16 %v951
    %v1089 = vunpack.c.l.b16 %v952
    %v1090 = vunpack.c.l.b16 %v953
    %v1091 = vunpack.c.l.b16 %v954
    %v1092 = vpack.c.b16 %v1077, %v1076
    %v1093 = vpack.c.b16 %v1079, %v1078
    %v1094 = vpack.c.b16 %v1081, %v1080
    %v1095 = vpack.c.b16 %v1083, %v1082
    %v1096 = vpack.c.b16 %v1085, %v1084
    %v1097 = vpack.c.b16 %v1087, %v1086
    %v1098 = vpack.c.b16 %v1089, %v1088
    %v1099 = vpack.c.b16 %v1091, %v1090
    %1108 = vmatprep.subr.bf16.mxu0 0
    %1109 = vmatpush1.bf16.msra.mxu0 %v1092
    %1110 = vmatprep.subr.bf16.mxu0 0
    %1111 = vmatpush1.bf16.msra.mxu0 %v1093
    %1112 = vmatprep.subr.bf16.mxu0 0
    %1113 = vmatpush1.bf16.msra.mxu0 %v1094
    %1114 = vmatprep.subr.bf16.mxu0 0
    %1115 = vmatpush1.bf16.msra.mxu0 %v1095
    %1116 = vmatprep.subr.bf16.mxu0 0
    %1117 = vmatpush1.bf16.msra.mxu0 %v1096
    %1118 = vmatprep.subr.bf16.mxu0 0
    %1119 = vmatpush1.bf16.msra.mxu0 %v1097
    %1120 = vmatprep.subr.bf16.mxu0 0
    %1121 = vmatpush1.bf16.msra.mxu0 %v1098
    %1122 = vmatprep.subr.bf16.mxu0 0
    %1123 = vmatpush1.bf16.msra.mxu0 %v1099
    %1124 = vmatprep.subr.bf16.mxu0 0
    %1125 = vmatpush1.bf16.msra.mxu0 0
    %1126 = vmatprep.subr.bf16.mxu0 0
    %1127 = vmatpush1.bf16.msra.mxu0 0
    %1128 = vmatprep.subr.bf16.mxu0 0
    %1129 = vmatpush1.bf16.msra.mxu0 0
    %1130 = vmatprep.subr.bf16.mxu0 0
    %1131 = vmatpush1.bf16.msra.mxu0 0
    %1132 = vmatprep.subr.bf16.mxu0 0
    %1133 = vmatpush1.bf16.msra.mxu0 0
    %1134 = vmatprep.subr.bf16.mxu0 0
    %1135 = vmatpush1.bf16.msra.mxu0 0
    %1136 = vmatprep.subr.bf16.mxu0 0
    %1137 = vmatpush1.bf16.msra.mxu0 0
    %1138 = vmatprep.subr.bf16.mxu0 0
    %1139 = vmatpush1.bf16.msra.mxu0 0
    %1140 = vmatprep.mubr.bf16.mxu0 0
    %1141 = vmatmul.mubr.bf16.gmra.mrb[0].mxu0 %v938
    %v1142 = vpop.f32.mrb[0].mxu0
    %v1143 = vadd.f32 %v1055, %v1142
    %v1144 = vpop.f32.mrb[0].mxu0
    %v1145 = vpop.f32.mrb[0].mxu0
    %v1146 = vpop.f32.mrb[0].mxu0
    %1147 = vdwg.mxu0
    %v1148 = vlaneseq
    %v1149 = vshrl.u32 %v1148, 7
    %v1150 = vsub.s32 0, %v1149
    %v1151 = vrot.slane %v42, %v1150
    %v1152 = vadd.f32 %v1143, %v1151
    %v1153 = vmax.f32 %v1152, 0.0
    %v1154 = vlaneseq
    %v1155 = vshrl.u32 %v1154, 7
    %v1156 = vsub.s32 0, %v1155
    %v1157 = vrot.slane %v43, %v1156
    %v1158 = vmul.f32 %v1153, %v1157
    %1159 = vadd.xlane.f32.xlu0 %v1158
    %v1160 = vpop.xlane.xlu0 %1159
    %v1161 = vlaneseq
    %v1162 = vshrl.u32 %v1161, 7
    %v1163 = vsub.s32 0, %v1162
    %v1164 = vrot.slane %v44, %v1163
    %v1165 = vadd.f32 %v1160, %v1164
    %vm1166 = vcmask 7168
    %1167 = vst.msk [vmem:[%s6] sm:$0xff] %vm1166, %v1165
    // Predicated region
    $region30: #{rnn_td3_critic.1} parent=1 // pred_check
      _
    $region31: #{rnn_td3_critic.1} parent=1 // pred_check_branch
      %1169 = sbr.rel (0) target = $region33
    $region32: #{rnn_td3_critic.1} parent=1 // pred_region
      _
    $region33: #{rnn_td3_critic.1} parent=1 // pred_fallthru
      _
    // Predicated region
    $region34: #{rnn_td3_critic.1} parent=1 // pred_check
      _
    $region35: #{rnn_td3_critic.1} parent=1 // pred_check_branch
      %1171 = sbr.rel (0) target = $region37
    $region36: #{rnn_td3_critic.1} parent=1 // pred_region
      _
    $region37: #{rnn_td3_critic.1} parent=1 // pred_fallthru
      _
    %1172 = vsyncpa [#allocation3], 1

</llo_original>
